<compile_context>
chip_gen: v7x
topology: tpu7x:2x2x1
jax: 0.10.0
libtpu: 0.0.40
codegen_flags: <defaults>
</compile_context>

<pallas_src>
import math
import jax
import jax.numpy as jnp
from jax.experimental import pallas as pl
from jax.experimental.pallas import tpu as pltpu


def actor_forward_kernel(x_ref, w1_ref, b1_ref, w2_ref, b2_ref, w3_ref, b3_ref,
                         o_ref):
    wdt = w1_ref.dtype  # matmul operand dtype (bf16 default); accumulate in f32

    # In-kernel cast of x (VPU, co-issues under the MXU). Avoids a host-side
    # XLA cast that would add a full extra HBM pass over x.
    x = x_ref[...].astype(wdt)

    # fc1 + ReLU  (MXU matmul, f32 accumulate; bias + ReLU on the VPU in f32)
    h1 = jnp.dot(x, w1_ref[...], preferred_element_type=jnp.float32)
    h1 = jnp.maximum(h1 + b1_ref[...], 0.0)

    # fc2 + ReLU
    h2 = jnp.dot(h1.astype(wdt), w2_ref[...],
                 preferred_element_type=jnp.float32)
    h2 = jnp.maximum(h2 + b2_ref[...], 0.0)

    # fc3 -- weights were pre-sliced to the first half (chunk(2, -1)[0]) and
    # zero-padded to a lane-dense multiple-of-128-column slab on the host, so
    # this dot's output IS the (padded) final result: no in-kernel slicing and
    # no masked narrow stores.
    y = jnp.dot(h2.astype(wdt), w3_ref[...], preferred_element_type=jnp.float32)
    o_ref[...] = (y + b3_ref[...]).astype(o_ref.dtype)


def _round_up(v, m):
    return ((v + m - 1) // m) * m


def actor_forward(x, params, *, compute_dtype=jnp.bfloat16, block_b=None,
                  out_dtype=jnp.float32):
    """Actor.forward: fc1->ReLU->fc2->ReLU->fc3->chunk(2, dim=-1)[0].

    Returns (B, action_dim // 2) in `out_dtype` (default f32).

    compute_dtype: dtype of the MXU matmul operands (x/h1/h2 + weights).
      bf16 is the default on all generations (v5e/v6e/v7x MXUs are bf16
      native); accumulation is always f32 and bias-add/ReLU run in f32.
      NOTE: on the bf16 path the *inputs* are quantized to bf16 too (not only
      the weights) -- a slightly looser contract than the f32 PyTorch
      reference. Pass compute_dtype=jnp.float32 for bit-close numerics.
    block_b: batch tile size (multiple of 8, or == B). Auto-chosen if None.
    """
    w1, b1, w2, b2, w3, b3 = params
    B, state_dim = x.shape
    action_dim = w3.shape[1]
    assert action_dim % 2 == 0, (
        "torch.chunk(2)[0] semantics here require an even action_dim")
    out_dim = action_dim // 2

    # Host-side slice of fc3 to the first half (chunk(2, dim=-1)[0]) ...
    w3 = w3[:, :out_dim]
    b3 = b3[:, :out_dim]
    # ... then zero-pad to a multiple of 128 output columns so the kernel's
    # final store is lane-dense (full `vst`, no masked partial stores / narrow
    # writeback DMA). The extra MXU columns are free; the wrapper slices back.
    pad_out = max(128, _round_up(out_dim, 128))
    if pad_out != out_dim:
        w3 = jnp.pad(w3, ((0, 0), (0, pad_out - out_dim)))
        b3 = jnp.pad(b3, ((0, 0), (0, pad_out - out_dim)))

    # Only the (tiny, reused) weights are pre-cast on the host; x stays f32 in
    # HBM and is cast inside the kernel. Biases stay f32.
    w1c = w1.astype(compute_dtype)
    w2c = w2.astype(compute_dtype)
    w3c = w3.astype(compute_dtype)

    # --- batch tile selection ------------------------------------------------
    if block_b is None:
        if B <= 16:
            block_b = B          # single tile; per-step overhead would dominate
        else:
            # Tiles of <= ~2048 rows (amortizes ~0.35us/grid-step overhead and
            # lengthens each dependent fc1->fc2->fc3 chain), and at least 2
            # tiles so dimension_semantics=("parallel",) can shard the batch
            # across both TensorCores on v7x (harmless on v5e/v6e: 1 TC).
            n_tiles = max(2, pl.cdiv(B, 2048))
            block_b = _round_up(pl.cdiv(B, n_tiles), 8)
    assert block_b == B or block_b % 8 == 0, (
        "block_b must be a multiple of 8 or equal to the batch size")
    grid = (pl.cdiv(B, block_b),)
    # NOTE: when B % block_b != 0 the padded tail rows of the last x tile
    # produce garbage rows that are discarded on writeback (the MLP is
    # row-independent, so this is numerically harmless), but they will show up
    # in NaN-scanning / debug_check tooling.

    # --- VMEM budget: pin the scoped limit only if the estimate is close to
    # v5e's 16 MiB default (e.g. very large block_b + 128-wide padded output).
    itm = jnp.dtype(compute_dtype).itemsize
    est_vmem = (2 * block_b * state_dim * 4                                # x (f32, dbl-buf)
                + 2 * block_b * pad_out * jnp.dtype(out_dtype).itemsize   # out (dbl-buf)
                + 2 * (w1c.size + w2c.size + w3c.size) * itm              # weights
                + 2 * (b1.size + b2.size + b3.size) * 4                   # biases
                + (1 << 20))                                              # slack
    vmem_limit = int(1.5 * est_vmem) if est_vmem > 12 * 1024 * 1024 else None

    def run(weight_pipeline_mode):
        if weight_pipeline_mode is None:
            resident = lambda shape: pl.BlockSpec(shape, lambda i: (0, 0))
        else:
            # Weights/biases never change block index -> a single buffer is
            # enough (saves the second VMEM copy + a little startup DMA).
            resident = lambda shape: pl.BlockSpec(
                shape, lambda i: (0, 0), pipeline_mode=weight_pipeline_mode)
        return pl.pallas_call(
            actor_forward_kernel,
            out_shape=jax.ShapeDtypeStruct((B, pad_out), out_dtype),
            grid=grid,
            in_specs=[
                pl.BlockSpec((block_b, state_dim), lambda i: (i, 0)),  # x: batch-tiled
                resident(w1c.shape), resident(b1.shape),
                resident(w2c.shape), resident(b2.shape),
                resident(w3c.shape), resident(b3.shape),
            ],
            out_specs=pl.BlockSpec((block_b, pad_out), lambda i: (i, 0)),
            compiler_params=pltpu.CompilerParams(
                dimension_semantics=("parallel",),   # shard batch tiles across TCs (v7x)
                vmem_limit_bytes=vmem_limit),        # None -> compiler default
        )(x, w1c, b1, w2c, b2, w3c, b3)

    try:
        out = run(pl.Buffered(1))
    except Exception:
        # Fallback if this jax/Mosaic build rejects single-buffered pipeline
        # mode on pallas_call operands; default double-buffering is ~170 KB of
        # extra VMEM here, which is harmless.
        out = run(None)

    # Slice the lane-dense slab back to the true output width.
    return out[:, :out_dim]


def init_linear(key, in_features, out_features):
    # Deterministic init mirroring PyTorch nn.Linear default:
    # U(-1/sqrt(fan_in), 1/sqrt(fan_in)); stored as (in, out) for x @ W.
    k_w, k_b = jax.random.split(key)
    bound = 1.0 / math.sqrt(in_features)
    w = jax.random.uniform(k_w, (in_features, out_features), jnp.float32,
                           minval=-bound, maxval=bound)
    b = jax.random.uniform(k_b, (1, out_features), jnp.float32,
                           minval=-bound, maxval=bound)
    return w, b


def init_actor_params(key, state_dim, action_dim):
    k1, k2, k3 = jax.random.split(key, 3)
    w1, b1 = init_linear(k1, state_dim, 256)
    w2, b2 = init_linear(k2, 256, 128)
    w3, b3 = init_linear(k3, 128, action_dim)
    return (w1, b1, w2, b2, w3, b3)


def actor_forward_ref(x, params):
    w1, b1, w2, b2, w3, b3 = params
    h1 = jnp.maximum(x @ w1 + b1, 0.0)
    h2 = jnp.maximum(h1 @ w2 + b2, 0.0)
    y = h2 @ w3 + b3
    return y[:, : y.shape[-1] // 2]


if __name__ == "__main__":
    key = jax.random.PRNGKey(0)
    k_params, k_x = jax.random.split(key)

    batch = 64        # auto tile picker -> block_b=32, grid=(2,) (exercises pipelining + v7x sharding)
    state_dim = 32
    action_dim = 8    # even; forward returns first action_dim // 2 columns

    params = init_actor_params(k_params, state_dim, action_dim)
    x = jax.random.normal(k_x, (batch, state_dim), dtype=jnp.float32)

    ref = actor_forward_ref(x, params)

    # Default fast path: bf16 operands (weights + in-kernel cast of x/h1/h2),
    # f32 accumulation. Looser tolerance vs. the f32 reference.
    out_bf16 = jax.block_until_ready(actor_forward(x, params))
    assert out_bf16.shape == (batch, action_dim // 2)
    assert jnp.allclose(out_bf16, ref, atol=5e-2, rtol=5e-2)

    # f32-operand path: bit-close to the reference.
    out_f32 = jax.block_until_ready(
        actor_forward(x, params, compute_dtype=jnp.float32))
    assert out_f32.shape == (batch, action_dim // 2)
    assert jnp.allclose(out_f32, ref, atol=1e-5, rtol=1e-5)

    print("KERNEL_OK")
</pallas_src>

<mosaic_0001>
module attributes {stable_mosaic.version = 11 : i64} {
  func.func @actor_forward_kernel(%arg0: i32, %arg1: memref<32x32xf32, #tpu.memory_space<vmem>>, %arg2: memref<32x256xbf16, #tpu.memory_space<vmem>>, %arg3: memref<1x256xf32, #tpu.memory_space<vmem>>, %arg4: memref<256x128xbf16, #tpu.memory_space<vmem>>, %arg5: memref<1x128xf32, #tpu.memory_space<vmem>>, %arg6: memref<128x128xbf16, #tpu.memory_space<vmem>>, %arg7: memref<1x128xf32, #tpu.memory_space<vmem>>, %arg8: memref<32x128xf32, #tpu.memory_space<vmem>>) attributes {dimension_semantics = [#tpu.dimension_semantics<parallel>], iteration_bounds = array<i64: 2>, scalar_prefetch = 0 : i64, scratch_operands = 0 : i64, tpu.core_type = #tpu.core_type<tc>, window_params = [{transform_indices = @transform_0, window_bounds = array<i64: 32, 32>}, {pipeline_mode = #tpu.pipeline_mode<synchronous>, transform_indices = @transform_1, window_bounds = array<i64: 32, 256>}, {pipeline_mode = #tpu.pipeline_mode<synchronous>, transform_indices = @transform_2, window_bounds = array<i64: 1, 256>}, {pipeline_mode = #tpu.pipeline_mode<synchronous>, transform_indices = @transform_3, window_bounds = array<i64: 256, 128>}, {pipeline_mode = #tpu.pipeline_mode<synchronous>, transform_indices = @transform_4, window_bounds = array<i64: 1, 128>}, {pipeline_mode = #tpu.pipeline_mode<synchronous>, transform_indices = @transform_5, window_bounds = array<i64: 128, 128>}, {pipeline_mode = #tpu.pipeline_mode<synchronous>, transform_indices = @transform_6, window_bounds = array<i64: 1, 128>}, {transform_indices = @transform_7, window_bounds = array<i64: 32, 128>}]} {
    %c0 = arith.constant 0 : index
    %c0_0 = arith.constant 0 : index
    %0 = vector.load %arg1[%c0, %c0_0] : memref<32x32xf32, #tpu.memory_space<vmem>>, vector<32x32xf32>
    %1 = arith.truncf %0 : vector<32x32xf32> to vector<32x32xbf16>
    %c0_1 = arith.constant 0 : index
    %c0_2 = arith.constant 0 : index
    %2 = vector.load %arg2[%c0_1, %c0_2] : memref<32x256xbf16, #tpu.memory_space<vmem>>, vector<32x256xbf16>
    %cst = arith.constant dense<0.000000e+00> : vector<32x256xf32>
    %3 = tpu.matmul %1, %2, %cst {dimension_numbers = #tpu.dot_dimension_numbers<[1], [0], [0], [1], [0, 0, 1, 1], [], []>} : vector<32x32xbf16>, vector<32x256xbf16>, vector<32x256xf32> -> vector<32x256xf32>
    %c0_3 = arith.constant 0 : index
    %c0_4 = arith.constant 0 : index
    %4 = vector.load %arg3[%c0_3, %c0_4] : memref<1x256xf32, #tpu.memory_space<vmem>>, vector<1x256xf32>
    %5 = vector.broadcast %4 : vector<1x256xf32> to vector<32x256xf32>
    %6 = arith.addf %3, %5 : vector<32x256xf32>
    %cst_5 = arith.constant 0.000000e+00 : f32
    %7 = vector.broadcast %cst_5 : f32 to vector<32x256xf32>
    %8 = arith.maximumf %6, %7 : vector<32x256xf32>
    %9 = arith.truncf %8 : vector<32x256xf32> to vector<32x256xbf16>
    %c0_6 = arith.constant 0 : index
    %c0_7 = arith.constant 0 : index
    %10 = vector.load %arg4[%c0_6, %c0_7] : memref<256x128xbf16, #tpu.memory_space<vmem>>, vector<256x128xbf16>
    %cst_8 = arith.constant dense<0.000000e+00> : vector<32x128xf32>
    %11 = tpu.matmul %9, %10, %cst_8 {dimension_numbers = #tpu.dot_dimension_numbers<[1], [0], [0], [1], [0, 0, 1, 1], [], []>} : vector<32x256xbf16>, vector<256x128xbf16>, vector<32x128xf32> -> vector<32x128xf32>
    %c0_9 = arith.constant 0 : index
    %c0_10 = arith.constant 0 : index
    %12 = vector.load %arg5[%c0_9, %c0_10] : memref<1x128xf32, #tpu.memory_space<vmem>>, vector<1x128xf32>
    %13 = vector.broadcast %12 : vector<1x128xf32> to vector<32x128xf32>
    %14 = arith.addf %11, %13 : vector<32x128xf32>
    %cst_11 = arith.constant 0.000000e+00 : f32
    %15 = vector.broadcast %cst_11 : f32 to vector<32x128xf32>
    %16 = arith.maximumf %14, %15 : vector<32x128xf32>
    %17 = arith.truncf %16 : vector<32x128xf32> to vector<32x128xbf16>
    %c0_12 = arith.constant 0 : index
    %c0_13 = arith.constant 0 : index
    %18 = vector.load %arg6[%c0_12, %c0_13] : memref<128x128xbf16, #tpu.memory_space<vmem>>, vector<128x128xbf16>
    %cst_14 = arith.constant dense<0.000000e+00> : vector<32x128xf32>
    %19 = tpu.matmul %17, %18, %cst_14 {dimension_numbers = #tpu.dot_dimension_numbers<[1], [0], [0], [1], [0, 0, 1, 1], [], []>} : vector<32x128xbf16>, vector<128x128xbf16>, vector<32x128xf32> -> vector<32x128xf32>
    %c0_15 = arith.constant 0 : index
    %c0_16 = arith.constant 0 : index
    %20 = vector.load %arg7[%c0_15, %c0_16] : memref<1x128xf32, #tpu.memory_space<vmem>>, vector<1x128xf32>
    %21 = vector.broadcast %20 : vector<1x128xf32> to vector<32x128xf32>
    %22 = arith.addf %19, %21 : vector<32x128xf32>
    %c0_17 = arith.constant 0 : index
    %c0_18 = arith.constant 0 : index
    %23 = vector.load %arg8[%c0_17, %c0_18] : memref<32x128xf32, #tpu.memory_space<vmem>>, vector<32x128xf32>
    tpu.vector_store %arg8[%c0_17, %c0_18], %22 {strides = array<i32>} : memref<32x128xf32, #tpu.memory_space<vmem>>, vector<32x128xf32>,
    return
  }
  func.func @transform_0(%arg0: i32) -> (i32, i32) {
    %c0_i32 = arith.constant 0 : i32
    %c0_i32_0 = arith.constant 0 : i32
    return %arg0, %c0_i32 : i32, i32
  }
  func.func @transform_1(%arg0: i32) -> (i32, i32) {
    %c0_i32 = arith.constant 0 : i32
    %c0_i32_0 = arith.constant 0 : i32
    %c0_i32_1 = arith.constant 0 : i32
    return %c0_i32, %c0_i32_0 : i32, i32
  }
  func.func @transform_2(%arg0: i32) -> (i32, i32) {
    %c0_i32 = arith.constant 0 : i32
    %c0_i32_0 = arith.constant 0 : i32
    %c0_i32_1 = arith.constant 0 : i32
    return %c0_i32, %c0_i32_0 : i32, i32
  }
  func.func @transform_3(%arg0: i32) -> (i32, i32) {
    %c0_i32 = arith.constant 0 : i32
    %c0_i32_0 = arith.constant 0 : i32
    %c0_i32_1 = arith.constant 0 : i32
    return %c0_i32, %c0_i32_0 : i32, i32
  }
  func.func @transform_4(%arg0: i32) -> (i32, i32) {
    %c0_i32 = arith.constant 0 : i32
    %c0_i32_0 = arith.constant 0 : i32
    %c0_i32_1 = arith.constant 0 : i32
    return %c0_i32, %c0_i32_0 : i32, i32
  }
  func.func @transform_5(%arg0: i32) -> (i32, i32) {
    %c0_i32 = arith.constant 0 : i32
    %c0_i32_0 = arith.constant 0 : i32
    %c0_i32_1 = arith.constant 0 : i32
    return %c0_i32, %c0_i32_0 : i32, i32
  }
  func.func @transform_6(%arg0: i32) -> (i32, i32) {
    %c0_i32 = arith.constant 0 : i32
    %c0_i32_0 = arith.constant 0 : i32
    %c0_i32_1 = arith.constant 0 : i32
    return %c0_i32, %c0_i32_0 : i32, i32
  }
  func.func @transform_7(%arg0: i32) -> (i32, i32) {
    %c0_i32 = arith.constant 0 : i32
    %c0_i32_0 = arith.constant 0 : i32
    return %arg0, %c0_i32 : i32, i32
  }
}

module attributes {stable_mosaic.version = 11 : i64} {
  func.func @actor_forward_kernel(%arg0: i32, %arg1: memref<32x32xf32, #tpu.memory_space<vmem>>, %arg2: memref<32x256xbf16, #tpu.memory_space<vmem>>, %arg3: memref<1x256xf32, #tpu.memory_space<vmem>>, %arg4: memref<256x128xbf16, #tpu.memory_space<vmem>>, %arg5: memref<1x128xf32, #tpu.memory_space<vmem>>, %arg6: memref<128x128xbf16, #tpu.memory_space<vmem>>, %arg7: memref<1x128xf32, #tpu.memory_space<vmem>>, %arg8: memref<32x128xf32, #tpu.memory_space<vmem>>) attributes {dimension_semantics = [#tpu.dimension_semantics<parallel>], iteration_bounds = array<i64: 2>, scalar_prefetch = 0 : i64, scratch_operands = 0 : i64, tpu.core_type = #tpu.core_type<tc>, window_params = [{transform_indices = @transform_0, window_bounds = array<i64: 32, 32>}, {pipeline_mode = #tpu.pipeline_mode<synchronous>, transform_indices = @transform_1, window_bounds = array<i64: 32, 256>}, {pipeline_mode = #tpu.pipeline_mode<synchronous>, transform_indices = @transform_2, window_bounds = array<i64: 1, 256>}, {pipeline_mode = #tpu.pipeline_mode<synchronous>, transform_indices = @transform_3, window_bounds = array<i64: 256, 128>}, {pipeline_mode = #tpu.pipeline_mode<synchronous>, transform_indices = @transform_4, window_bounds = array<i64: 1, 128>}, {pipeline_mode = #tpu.pipeline_mode<synchronous>, transform_indices = @transform_5, window_bounds = array<i64: 128, 128>}, {pipeline_mode = #tpu.pipeline_mode<synchronous>, transform_indices = @transform_6, window_bounds = array<i64: 1, 128>}, {transform_indices = @transform_7, window_bounds = array<i64: 32, 128>}]} {
    %c0 = arith.constant 0 : index
    %c0_0 = arith.constant 0 : index
    %0 = vector.load %arg1[%c0, %c0_0] : memref<32x32xf32, #tpu.memory_space<vmem>>, vector<32x32xf32>
    %1 = arith.truncf %0 : vector<32x32xf32> to vector<32x32xbf16>
    %c0_1 = arith.constant 0 : index
    %c0_2 = arith.constant 0 : index
    %2 = vector.load %arg2[%c0_1, %c0_2] : memref<32x256xbf16, #tpu.memory_space<vmem>>, vector<32x256xbf16>
    %cst = arith.constant dense<0.000000e+00> : vector<32x256xf32>
    %3 = tpu.matmul %1, %2, %cst {dimension_numbers = #tpu.dot_dimension_numbers<[1], [0], [0], [1], [0, 0, 1, 1], [], []>} : vector<32x32xbf16>, vector<32x256xbf16>, vector<32x256xf32> -> vector<32x256xf32>
    %c0_3 = arith.constant 0 : index
    %c0_4 = arith.constant 0 : index
    %4 = vector.load %arg3[%c0_3, %c0_4] : memref<1x256xf32, #tpu.memory_space<vmem>>, vector<1x256xf32>
    %5 = vector.broadcast %4 : vector<1x256xf32> to vector<32x256xf32>
    %6 = arith.addf %3, %5 : vector<32x256xf32>
    %cst_5 = arith.constant 0.000000e+00 : f32
    %7 = vector.broadcast %cst_5 : f32 to vector<32x256xf32>
    %8 = arith.maximumf %6, %7 : vector<32x256xf32>
    %9 = arith.truncf %8 : vector<32x256xf32> to vector<32x256xbf16>
    %c0_6 = arith.constant 0 : index
    %c0_7 = arith.constant 0 : index
    %10 = vector.load %arg4[%c0_6, %c0_7] : memref<256x128xbf16, #tpu.memory_space<vmem>>, vector<256x128xbf16>
    %cst_8 = arith.constant dense<0.000000e+00> : vector<32x128xf32>
    %11 = tpu.matmul %9, %10, %cst_8 {dimension_numbers = #tpu.dot_dimension_numbers<[1], [0], [0], [1], [0, 0, 1, 1], [], []>} : vector<32x256xbf16>, vector<256x128xbf16>, vector<32x128xf32> -> vector<32x128xf32>
    %c0_9 = arith.constant 0 : index
    %c0_10 = arith.constant 0 : index
    %12 = vector.load %arg5[%c0_9, %c0_10] : memref<1x128xf32, #tpu.memory_space<vmem>>, vector<1x128xf32>
    %13 = vector.broadcast %12 : vector<1x128xf32> to vector<32x128xf32>
    %14 = arith.addf %11, %13 : vector<32x128xf32>
    %cst_11 = arith.constant 0.000000e+00 : f32
    %15 = vector.broadcast %cst_11 : f32 to vector<32x128xf32>
    %16 = arith.maximumf %14, %15 : vector<32x128xf32>
    %17 = arith.truncf %16 : vector<32x128xf32> to vector<32x128xbf16>
    %c0_12 = arith.constant 0 : index
    %c0_13 = arith.constant 0 : index
    %18 = vector.load %arg6[%c0_12, %c0_13] : memref<128x128xbf16, #tpu.memory_space<vmem>>, vector<128x128xbf16>
    %cst_14 = arith.constant dense<0.000000e+00> : vector<32x128xf32>
    %19 = tpu.matmul %17, %18, %cst_14 {dimension_numbers = #tpu.dot_dimension_numbers<[1], [0], [0], [1], [0, 0, 1, 1], [], []>} : vector<32x128xbf16>, vector<128x128xbf16>, vector<32x128xf32> -> vector<32x128xf32>
    %c0_15 = arith.constant 0 : index
    %c0_16 = arith.constant 0 : index
    %20 = vector.load %arg7[%c0_15, %c0_16] : memref<1x128xf32, #tpu.memory_space<vmem>>, vector<1x128xf32>
    %21 = vector.broadcast %20 : vector<1x128xf32> to vector<32x128xf32>
    %22 = arith.addf %19, %21 : vector<32x128xf32>
    %c0_17 = arith.constant 0 : index
    %c0_18 = arith.constant 0 : index
    %23 = vector.load %arg8[%c0_17, %c0_18] : memref<32x128xf32, #tpu.memory_space<vmem>>, vector<32x128xf32>
    tpu.vector_store %arg8[%c0_17, %c0_18], %22 {strides = array<i32>} : memref<32x128xf32, #tpu.memory_space<vmem>>, vector<32x128xf32>,
    return
  }
  func.func @transform_0(%arg0: i32) -> (i32, i32) {
    %c0_i32 = arith.constant 0 : i32
    %c0_i32_0 = arith.constant 0 : i32
    return %arg0, %c0_i32 : i32, i32
  }
  func.func @transform_1(%arg0: i32) -> (i32, i32) {
    %c0_i32 = arith.constant 0 : i32
    %c0_i32_0 = arith.constant 0 : i32
    %c0_i32_1 = arith.constant 0 : i32
    return %c0_i32, %c0_i32_0 : i32, i32
  }
  func.func @transform_2(%arg0: i32) -> (i32, i32) {
    %c0_i32 = arith.constant 0 : i32
    %c0_i32_0 = arith.constant 0 : i32
    %c0_i32_1 = arith.constant 0 : i32
    return %c0_i32, %c0_i32_0 : i32, i32
  }
  func.func @transform_3(%arg0: i32) -> (i32, i32) {
    %c0_i32 = arith.constant 0 : i32
    %c0_i32_0 = arith.constant 0 : i32
    %c0_i32_1 = arith.constant 0 : i32
    return %c0_i32, %c0_i32_0 : i32, i32
  }
  func.func @transform_4(%arg0: i32) -> (i32, i32) {
    %c0_i32 = arith.constant 0 : i32
    %c0_i32_0 = arith.constant 0 : i32
    %c0_i32_1 = arith.constant 0 : i32
    return %c0_i32, %c0_i32_0 : i32, i32
  }
  func.func @transform_5(%arg0: i32) -> (i32, i32) {
    %c0_i32 = arith.constant 0 : i32
    %c0_i32_0 = arith.constant 0 : i32
    %c0_i32_1 = arith.constant 0 : i32
    return %c0_i32, %c0_i32_0 : i32, i32
  }
  func.func @transform_6(%arg0: i32) -> (i32, i32) {
    %c0_i32 = arith.constant 0 : i32
    %c0_i32_0 = arith.constant 0 : i32
    %c0_i32_1 = arith.constant 0 : i32
    return %c0_i32, %c0_i32_0 : i32, i32
  }
  func.func @transform_7(%arg0: i32) -> (i32, i32) {
    %c0_i32 = arith.constant 0 : i32
    %c0_i32_0 = arith.constant 0 : i32
    return %arg0, %c0_i32 : i32, i32
  }
}

</mosaic_0001>

<llo_original>
// kernel: tpu_custom_call.1
$region0: #{tpu_custom_call.1}
  #allocation0 [shape = 'u32[]', space=smem, size = 0x4, offset = 0x4, fixed_abs, tag = 'smem constant byte address 0x4 - core index']
  #allocation1 [shape = 'u32[144,128]{1,0:T(1,128)}', space=vmem, size = 0x12000, scoped, tag = 'internal scratch']
  %s0 = inlined_call_operand.vmem [shape: f32[64,32], index: 0, kind: input, shape index: {}]
  %s1 = inlined_call_operand.vmem [shape: bf16[32,256], index: 1, kind: input, shape index: {}]
  %s2 = inlined_call_operand.vmem [shape: f32[1,256], index: 2, kind: input, shape index: {}]
  %s3 = inlined_call_operand.hbm [shape: bf16[256,128], index: 3, kind: input, shape index: {}]
  %s4 = inlined_call_operand.vmem [shape: f32[1,128], index: 4, kind: input, shape index: {}]
  %s5 = inlined_call_operand.vmem [shape: bf16[128,128], index: 5, kind: input, shape index: {}]
  %s6 = inlined_call_operand.vmem [shape: f32[1,128], index: 6, kind: input, shape index: {}]
  %s7 = inlined_call_operand.hbm [shape: f32[64,128], index: 7, kind: output, shape index: {}]
  %s8 = sld [smem:[#allocation0]]
  $region65: #{tpu_custom_call.1} parent=0
    _
  %s10 = ssub.s32 1, %s8
  %s11 = scalar_select 0, %s10, %s8
  $region1: #{tpu_custom_call.1} parent=0
    #allocation2 [shape = 'u8[65536]{0}', space=vmem, size = 0x10000, scoped, tag = 'input window, operand 3, single buffered']
    #allocation3 [shape = 's32[2]{0}', space=sflag, size = 0x8, scoped, tag = 'scoped memory for tpu_custom_call.1']
    #allocation4 [shape = 's32[2]{0}', space=sflag, size = 0x8, scoped, tag = 'scoped memory for tpu_custom_call.1']
    #allocation5 [shape = 'u8[32768]{0}', space=vmem, size = 0x8000, scoped, tag = 'output window, operand 0']
    %12 = vsyncpa [#allocation3], 0
    %13 = vsyncpa [#allocation4], 0
    %s14 = scalar_lea.sflag [#allocation4], 1
    %15 = vsyncpa %s14, 0
    loop: start=0, step=1, limit=4
    $region2: #{tpu_custom_call.1} parent=1 // loop_pre_header
      _
    $region3: #{tpu_custom_call.1} parent=1 // loop_header
      %s17 = sphi 0, %s21
      %p18 = scmp.ge.s32.totalorder %s17, 4
      %s27 = sphi 0, %s29
      %s30 = sphi 0, %s27
      %s31 = sphi 0, %s30
      %s47 = sphi 0, %s31
      %s51 = sphi 0, %s51
      %s53 = sphi 0, %s51
      %s54 = sphi 0, %s53
      %s68 = sphi 0, %s54
      %s72 = sphi 0, %s72
      %s74 = sphi 0, %s72
      %s75 = sphi 0, %s74
      %s89 = sphi 0, %s75
      %s93 = sphi 0, %s93
      %s95 = sphi 0, %s93
      %s96 = sphi 0, %s95
      %s110 = sphi 0, %s96
      %s114 = sphi 0, %s114
      %s116 = sphi 0, %s114
      %s117 = sphi 0, %s116
      %s131 = sphi 0, %s117
      %s135 = sphi 0, %s135
      %s137 = sphi 0, %s135
      %s138 = sphi 0, %s137
      %s152 = sphi 0, %s138
      %s156 = sphi 0, %s156
      %s158 = sphi 0, %s156
      %s159 = sphi 0, %s158
      %s173 = sphi 0, %s159
      %s179 = sphi 0, %s181
      %s182 = sphi 0, %s179
      %s183 = sphi 0, %s182
      %s199 = sphi 0, %s183
    $region4: #{tpu_custom_call.1} parent=1 // loop_header_branch
      %20 = sbr.rel (%p18) target = $region8
    $region5: #{tpu_custom_call.1} parent=1 // loop_body
      %s22 = ssub.s32 %s17, 1
      %s23 = ssub.s32 %s17, 2
      %s24 = sadd.s32 %s17, 1
      %s25 = ssub.s32 %s17, %s24
      %p26 = scmp.eq.s32.totalorder %s25, 0
      %s28 = sadd.s32 %s27, 1
      %s29 = scalar_select %p26, %s27, %s28
      %p32 = pneg %p26
      %p33 = scmp.eq.s32.totalorder %s17, 1
      %p34 = por %p32, %p33
      %p35 = scmp.ne.s32.totalorder %s27, %s30
      %p36 = scmp.eq.s32.totalorder %s17, 0
      %p37 = por %p35, %p36
      %p38 = scmp.ne.s32.totalorder %s27, %s30
      %p39 = scmp.eq.s32.totalorder %s22, 1
      %p40 = por %p38, %p39
      %p41 = scmp.ne.s32.totalorder %s30, %s31
      %p42 = scmp.eq.s32.totalorder %s22, 0
      %p43 = por %p41, %p42
      %p44 = scmp.ne.s32.totalorder %s30, %s31
      %p45 = scmp.eq.s32.totalorder %s23, 1
      %p46 = por %p44, %p45
      %p48 = scmp.ne.s32.totalorder %s31, %s47
      %p49 = scmp.eq.s32.totalorder %s23, 0
      %p50 = por %p48, %p49
      %s52 = sadd.s32 %s51, 1
      %p55 = scmp.eq.s32.totalorder %s17, 1
      %p56 = scmp.ne.s32.totalorder %s51, %s53
      %p57 = scmp.eq.s32.totalorder %s17, 0
      %p58 = por %p56, %p57
      %p59 = scmp.ne.s32.totalorder %s51, %s53
      %p60 = scmp.eq.s32.totalorder %s22, 1
      %p61 = por %p59, %p60
      %p62 = scmp.ne.s32.totalorder %s53, %s54
      %p63 = scmp.eq.s32.totalorder %s22, 0
      %p64 = por %p62, %p63
      %p65 = scmp.ne.s32.totalorder %s53, %s54
      %p66 = scmp.eq.s32.totalorder %s23, 1
      %p67 = por %p65, %p66
      %p69 = scmp.ne.s32.totalorder %s54, %s68
      %p70 = scmp.eq.s32.totalorder %s23, 0
      %p71 = por %p69, %p70
      %s73 = sadd.s32 %s72, 1
      %p76 = scmp.eq.s32.totalorder %s17, 1
      %p77 = scmp.ne.s32.totalorder %s72, %s74
      %p78 = scmp.eq.s32.totalorder %s17, 0
      %p79 = por %p77, %p78
      %p80 = scmp.ne.s32.totalorder %s72, %s74
      %p81 = scmp.eq.s32.totalorder %s22, 1
      %p82 = por %p80, %p81
      %p83 = scmp.ne.s32.totalorder %s74, %s75
      %p84 = scmp.eq.s32.totalorder %s22, 0
      %p85 = por %p83, %p84
      %p86 = scmp.ne.s32.totalorder %s74, %s75
      %p87 = scmp.eq.s32.totalorder %s23, 1
      %p88 = por %p86, %p87
      %p90 = scmp.ne.s32.totalorder %s75, %s89
      %p91 = scmp.eq.s32.totalorder %s23, 0
      %p92 = por %p90, %p91
      %s94 = sadd.s32 %s93, 1
      %p97 = scmp.eq.s32.totalorder %s17, 1
      %p98 = scmp.ne.s32.totalorder %s93, %s95
      %p99 = scmp.eq.s32.totalorder %s17, 0
      %p100 = por %p98, %p99
      %p101 = scmp.ne.s32.totalorder %s93, %s95
      %p102 = scmp.eq.s32.totalorder %s22, 1
      %p103 = por %p101, %p102
      %p104 = scmp.ne.s32.totalorder %s95, %s96
      %p105 = scmp.eq.s32.totalorder %s22, 0
      %p106 = por %p104, %p105
      %p107 = scmp.ne.s32.totalorder %s95, %s96
      %p108 = scmp.eq.s32.totalorder %s23, 1
      %p109 = por %p107, %p108
      %p111 = scmp.ne.s32.totalorder %s96, %s110
      %p112 = scmp.eq.s32.totalorder %s23, 0
      %p113 = por %p111, %p112
      %s115 = sadd.s32 %s114, 1
      %p118 = scmp.eq.s32.totalorder %s17, 1
      %p119 = scmp.ne.s32.totalorder %s114, %s116
      %p120 = scmp.eq.s32.totalorder %s17, 0
      %p121 = por %p119, %p120
      %p122 = scmp.ne.s32.totalorder %s114, %s116
      %p123 = scmp.eq.s32.totalorder %s22, 1
      %p124 = por %p122, %p123
      %p125 = scmp.ne.s32.totalorder %s116, %s117
      %p126 = scmp.eq.s32.totalorder %s22, 0
      %p127 = por %p125, %p126
      %p128 = scmp.ne.s32.totalorder %s116, %s117
      %p129 = scmp.eq.s32.totalorder %s23, 1
      %p130 = por %p128, %p129
      %p132 = scmp.ne.s32.totalorder %s117, %s131
      %p133 = scmp.eq.s32.totalorder %s23, 0
      %p134 = por %p132, %p133
      %s136 = sadd.s32 %s135, 1
      %p139 = scmp.eq.s32.totalorder %s17, 1
      %p140 = scmp.ne.s32.totalorder %s135, %s137
      %p141 = scmp.eq.s32.totalorder %s17, 0
      %p142 = por %p140, %p141
      %p143 = scmp.ne.s32.totalorder %s135, %s137
      %p144 = scmp.eq.s32.totalorder %s22, 1
      %p145 = por %p143, %p144
      %p146 = scmp.ne.s32.totalorder %s137, %s138
      %p147 = scmp.eq.s32.totalorder %s22, 0
      %p148 = por %p146, %p147
      %p149 = scmp.ne.s32.totalorder %s137, %s138
      %p150 = scmp.eq.s32.totalorder %s23, 1
      %p151 = por %p149, %p150
      %p153 = scmp.ne.s32.totalorder %s138, %s152
      %p154 = scmp.eq.s32.totalorder %s23, 0
      %p155 = por %p153, %p154
      %s157 = sadd.s32 %s156, 1
      %p160 = scmp.eq.s32.totalorder %s17, 1
      %p161 = scmp.ne.s32.totalorder %s156, %s158
      %p162 = scmp.eq.s32.totalorder %s17, 0
      %p163 = por %p161, %p162
      %p164 = scmp.ne.s32.totalorder %s156, %s158
      %p165 = scmp.eq.s32.totalorder %s22, 1
      %p166 = por %p164, %p165
      %p167 = scmp.ne.s32.totalorder %s158, %s159
      %p168 = scmp.eq.s32.totalorder %s22, 0
      %p169 = por %p167, %p168
      %p170 = scmp.ne.s32.totalorder %s158, %s159
      %p171 = scmp.eq.s32.totalorder %s23, 1
      %p172 = por %p170, %p171
      %p174 = scmp.ne.s32.totalorder %s159, %s173
      %p175 = scmp.eq.s32.totalorder %s23, 0
      %p176 = por %p174, %p175
      %s177 = ssub.s32 %s17, %s24
      %p178 = scmp.eq.s32.totalorder %s177, 0
      %s180 = sadd.s32 %s179, 1
      %s181 = scalar_select %p178, %s179, %s180
      %p184 = pneg %p178
      %p185 = scmp.eq.s32.totalorder %s17, 1
      %p186 = por %p184, %p185
      %p187 = scmp.ne.s32.totalorder %s179, %s182
      %p188 = scmp.eq.s32.totalorder %s17, 0
      %p189 = por %p187, %p188
      %p190 = scmp.ne.s32.totalorder %s179, %s182
      %p191 = scmp.eq.s32.totalorder %s22, 1
      %p192 = por %p190, %p191
      %p193 = scmp.ne.s32.totalorder %s182, %s183
      %p194 = scmp.eq.s32.totalorder %s22, 0
      %p195 = por %p193, %p194
      %p196 = scmp.ne.s32.totalorder %s182, %s183
      %p197 = scmp.eq.s32.totalorder %s23, 1
      %p198 = por %p196, %p197
      %p200 = scmp.ne.s32.totalorder %s183, %s199
      %p201 = scmp.eq.s32.totalorder %s23, 0
      %p202 = por %p200, %p201
      %p203 = scmp.le.s32.totalorder 1, %s17
      %p204 = scmp.lt.s32.totalorder %s17, 3
      %p205 = pnand %p203, %p204
      %p206 = pneg %p205
      // Predicated region
      $region9: #{tpu_custom_call.1} parent=5 // pred_check
        _
      $region10: #{tpu_custom_call.1} parent=5 // pred_check_branch
        %208 = sbr.rel (%p205) target = $region12
      $region11: #{tpu_custom_call.1} parent=5 // pred_region
        %s209 = ssub.s32 %s17, 1
        // Predicated region
        $region13: #{tpu_custom_call.1} parent=11 // pred_check
          %p210 = pneg %p64
        $region14: #{tpu_custom_call.1} parent=11 // pred_check_branch
          %212 = sbr.rel (%p210) target = $region16
        $region15: #{tpu_custom_call.1} parent=11 // pred_region
          _
        $region16: #{tpu_custom_call.1} parent=11 // pred_fallthru
          _
        // Predicated region
        $region17: #{tpu_custom_call.1} parent=11 // pred_check
          %p213 = pneg %p85
        $region18: #{tpu_custom_call.1} parent=11 // pred_check_branch
          %215 = sbr.rel (%p213) target = $region20
        $region19: #{tpu_custom_call.1} parent=11 // pred_region
          _
        $region20: #{tpu_custom_call.1} parent=11 // pred_fallthru
          _
        // Predicated region
        $region21: #{tpu_custom_call.1} parent=11 // pred_check
          %p216 = pneg %p106
        $region22: #{tpu_custom_call.1} parent=11 // pred_check_branch
          %218 = sbr.rel (%p216) target = $region24
        $region23: #{tpu_custom_call.1} parent=11 // pred_region
          %s220 = ssub.s32 2048, 2048
          %221 = vsyncadd [#allocation3], %s220
          %s222 = sshll.u32 [#allocation2], 4
          %s223 = int_to_ptr.vmem [resolvable:$true] %s222
          %228 = dma.hbm_to_vmem [thread:$0]  %s3, 2048, %s223, [#allocation3], 64, 64, 4
        $region24: #{tpu_custom_call.1} parent=11 // pred_fallthru
          _
        // Predicated region
        $region25: #{tpu_custom_call.1} parent=11 // pred_check
          %p229 = pneg %p127
        $region26: #{tpu_custom_call.1} parent=11 // pred_check_branch
          %231 = sbr.rel (%p229) target = $region28
        $region27: #{tpu_custom_call.1} parent=11 // pred_region
          _
        $region28: #{tpu_custom_call.1} parent=11 // pred_fallthru
          _
        // Predicated region
        $region29: #{tpu_custom_call.1} parent=11 // pred_check
          %p232 = pneg %p148
        $region30: #{tpu_custom_call.1} parent=11 // pred_check_branch
          %234 = sbr.rel (%p232) target = $region32
        $region31: #{tpu_custom_call.1} parent=11 // pred_region
          _
        $region32: #{tpu_custom_call.1} parent=11 // pred_fallthru
          _
        // Predicated region
        $region33: #{tpu_custom_call.1} parent=11 // pred_check
          %p235 = pneg %p169
        $region34: #{tpu_custom_call.1} parent=11 // pred_check_branch
          %237 = sbr.rel (%p235) target = $region36
        $region35: #{tpu_custom_call.1} parent=11 // pred_region
          _
        $region36: #{tpu_custom_call.1} parent=11 // pred_fallthru
          _
      $region12: #{tpu_custom_call.1} parent=5 // pred_fallthru
        _
      %p238 = scmp.lt.s32.totalorder %s17, 2
      // Predicated region
      $region37: #{tpu_custom_call.1} parent=5 // pred_check
        %p239 = pneg %p238
      $region38: #{tpu_custom_call.1} parent=5 // pred_check_branch
        %241 = sbr.rel (%p239) target = $region40
      $region39: #{tpu_custom_call.1} parent=5 // pred_region
        // Predicated region
        $region41: #{tpu_custom_call.1} parent=39 // pred_check
          %p242 = pneg %p37
        $region42: #{tpu_custom_call.1} parent=39 // pred_check_branch
          %244 = sbr.rel (%p242) target = $region44
        $region43: #{tpu_custom_call.1} parent=39 // pred_region
          %s245 = smul.u32 4, %s17
          %p246 = scmp.lt.s32.totalorder %s245, 7
          %s247 = scalar_select %p246, %s245, 7
          %s248 = smul.addr %s247, 8
          %s249 = scalar_lea.vmem %s0, %s248
          %s250 = smul.u32 4, %s17
        $region44: #{tpu_custom_call.1} parent=39 // pred_fallthru
          _
      $region40: #{tpu_custom_call.1} parent=5 // pred_fallthru
        _
      %p251 = scmp.le.s32.totalorder 1, %s17
      %p252 = scmp.lt.s32.totalorder %s17, 3
      %p253 = pnand %p251, %p252
      %p254 = pneg %p253
      // Predicated region
      $region45: #{tpu_custom_call.1} parent=5 // pred_check
        _
      $region46: #{tpu_custom_call.1} parent=5 // pred_check_branch
        %256 = sbr.rel (%p253) target = $region48
      $region47: #{tpu_custom_call.1} parent=5 // pred_region
        %s257 = ssub.s32 %s17, 1
        // Predicated region
        $region49: #{tpu_custom_call.1} parent=47 // pred_check
          %p258 = pneg %p106
        $region50: #{tpu_custom_call.1} parent=47 // pred_check_branch
          %260 = sbr.rel (%p258) target = $region52
        $region51: #{tpu_custom_call.1} parent=47 // pred_region
          %261 = dma.done [#allocation3], 2048
        $region52: #{tpu_custom_call.1} parent=47 // pred_fallthru
          _
        %s262 = smul.u32 4, %s22
        %p263 = scmp.lt.s32.totalorder %s262, 7
        %s264 = scalar_select %p263, %s262, 7
        %s265 = smul.addr %s264, 8
        %s266 = scalar_lea.vmem %s0, %s265
        %p267 = pneg %p43
        %p268 = pneg %p40
        %p269 = pneg %p64
        %p270 = pneg %p61
        %p271 = pneg %p85
        %p272 = pneg %p82
        %p273 = pneg %p106
        %p274 = pneg %p103
        %p275 = pneg %p127
        %p276 = pneg %p124
        %p277 = pneg %p148
        %p278 = pneg %p145
        %p279 = pneg %p169
        %p280 = pneg %p166
        %p281 = pneg %p195
        %p282 = pneg %p192
        %s283 = sand.u32 %s182, 1
        %s284 = scalar_lea.sflag [#allocation4], %s283
        %s285 = sand.u32 %s182, 1
        %s286 = smul.addr %s285, 32
        %s287 = scalar_lea.vmem [#allocation5], %s286
        %s288 = smul.u32 4, %s22
        %p289 = scmp.lt.s32.totalorder %s288, 7
        %s290 = scalar_select %p289, %s288, 7
        %s291 = smul.addr %s290, 8
        %s292 = scalar_lea.vmem %s0, %s291
        %s293 = smul.u32 4, %s22
        %s294 = smul.u32 4, %s22
        %v296 = vld [vmem:[%s292] sm:$0xff]
        %v297 = vld [vmem:[%s292 + $0x8] sm:$0xff]
        %v298 = vld [vmem:[%s292 + $0x10] sm:$0xff]
        %v299 = vld [vmem:[%s292 + $0x18] sm:$0xff]
        %v300 = vpack.c.bf16 %v297, %v296
        %v301 = vpack.c.bf16 %v299, %v298
        %v302 = vld [vmem:[%s1] sm:$0xff]
        %v303 = vld [vmem:[%s1 + $0x8] sm:$0xff]
        %v304 = vld [vmem:[%s1 + $0x10] sm:$0xff]
        %v305 = vld [vmem:[%s1 + $0x18] sm:$0xff]
        %v306 = vld [vmem:[%s2] sm:$0x3]
        %v308 = vlaneseq
        %v309 = vshrl.u32 %v308, 7
        %v310 = vsub.s32 0, %v309
        %v311 = vrot.slane %v306, %v310
        %v312 = vlaneseq
        %v313 = vshrl.u32 %v312, 7
        %v314 = vsub.s32 1, %v313
        %v315 = vrot.slane %v306, %v314
        %v322 = vunpack.c.l.b16 %v302
        %v323 = vunpack.c.h.b16 %v302
        %v324 = vunpack.c.l.b16 %v303
        %v325 = vunpack.c.h.b16 %v303
        %v326 = vunpack.c.l.b16 %v304
        %v327 = vunpack.c.h.b16 %v304
        %v328 = vunpack.c.l.b16 %v305
        %v329 = vunpack.c.h.b16 %v305
        %v330 = vpack.c.b16 %v324, %v322
        %v331 = vpack.c.b16 %v325, %v323
        %v332 = vpack.c.b16 %v328, %v326
        %v333 = vpack.c.b16 %v329, %v327
        %vm338 = vcmask 261120
        %v340 = vsel %vm338, %v300, 0
        %v343 = vsel %vm338, %v301, 0
        %345 = vmatprep.subr.bf16.mxu0 %v331
        %346 = vmatpush1.bf16.msra.mxu0 %v330
        %347 = vmatprep.subr.bf16.mxu0 %v333
        %348 = vmatpush1.bf16.msra.mxu0 %v332
        %349 = vmatprep.subr.bf16.mxu0 0
        %350 = vmatpush1.bf16.msra.mxu0 0
        %351 = vmatprep.subr.bf16.mxu0 0
        %352 = vmatpush1.bf16.msra.mxu0 0
        %353 = vmatprep.subr.bf16.mxu0 0
        %354 = vmatpush1.bf16.msra.mxu0 0
        %355 = vmatprep.subr.bf16.mxu0 0
        %356 = vmatpush1.bf16.msra.mxu0 0
        %357 = vmatprep.subr.bf16.mxu0 0
        %358 = vmatpush1.bf16.msra.mxu0 0
        %359 = vmatprep.subr.bf16.mxu0 0
        %360 = vmatpush1.bf16.msra.mxu0 0
        %361 = vmatprep.subr.bf16.mxu0 0
        %362 = vmatpush1.bf16.msra.mxu0 0
        %363 = vmatprep.subr.bf16.mxu0 0
        %364 = vmatpush1.bf16.msra.mxu0 0
        %365 = vmatprep.subr.bf16.mxu0 0
        %366 = vmatpush1.bf16.msra.mxu0 0
        %367 = vmatprep.subr.bf16.mxu0 0
        %368 = vmatpush1.bf16.msra.mxu0 0
        %369 = vmatprep.subr.bf16.mxu0 0
        %370 = vmatpush1.bf16.msra.mxu0 0
        %371 = vmatprep.subr.bf16.mxu0 0
        %372 = vmatpush1.bf16.msra.mxu0 0
        %373 = vmatprep.subr.bf16.mxu0 0
        %374 = vmatpush1.bf16.msra.mxu0 0
        %375 = vmatprep.subr.bf16.mxu0 0
        %376 = vmatpush1.bf16.msra.mxu0 0
        %377 = vmatprep.mubr.bf16.mxu0 0
        %378 = vmatmul.mubr.bf16.gmra.mrb[0].mxu0 %v340
        %v379 = vpop.f32.mrb[0].mxu0
        %v380 = vadd.f32 %v311, %v379
        %v381 = vpop.f32.mrb[0].mxu0
        %v382 = vadd.f32 %v315, %v381
        %v383 = vpop.f32.mrb[0].mxu0
        %v384 = vadd.f32 %v311, %v383
        %v385 = vpop.f32.mrb[0].mxu0
        %v386 = vadd.f32 %v315, %v385
        %387 = vmatprep.mubr.bf16.mxu0 0
        %388 = vmatmul.mubr.bf16.gmra.mrb[0].mxu0 %v343
        %v389 = vpop.f32.mrb[0].mxu0
        %v390 = vadd.f32 %v311, %v389
        %v391 = vpop.f32.mrb[0].mxu0
        %v392 = vadd.f32 %v315, %v391
        %v393 = vpop.f32.mrb[0].mxu0
        %v394 = vadd.f32 %v311, %v393
        %v395 = vpop.f32.mrb[0].mxu0
        %v396 = vadd.f32 %v315, %v395
        %397 = vdwg.mxu0
        %v398 = vmax.f32 %v380, 0.0
        %v399 = vmax.f32 %v382, 0.0
        %v400 = vmax.f32 %v384, 0.0
        %v401 = vmax.f32 %v386, 0.0
        %v402 = vmax.f32 %v390, 0.0
        %v403 = vmax.f32 %v392, 0.0
        %v404 = vmax.f32 %v394, 0.0
        %v405 = vmax.f32 %v396, 0.0
        %v406 = vpack.c.bf16 %v400, %v398
        %v407 = vpack.c.bf16 %v401, %v399
        %v408 = vpack.c.bf16 %v404, %v402
        %v409 = vpack.c.bf16 %v405, %v403
        %v410 = vld [vmem:[#allocation2] sm:$0xf]
        %v411 = vld [vmem:[#allocation2 + $0x4] sm:$0xf]
        %v412 = vld [vmem:[#allocation2 + $0x8] sm:$0xf]
        %v413 = vld [vmem:[#allocation2 + $0xc] sm:$0xf]
        %v414 = vld [vmem:[#allocation2 + $0x10] sm:$0xf]
        %v415 = vld [vmem:[#allocation2 + $0x14] sm:$0xf]
        %v416 = vld [vmem:[#allocation2 + $0x18] sm:$0xf]
        %v417 = vld [vmem:[#allocation2 + $0x1c] sm:$0xf]
        %v418 = vld [vmem:[#allocation2 + $0x20] sm:$0xf]
        %v419 = vld [vmem:[#allocation2 + $0x24] sm:$0xf]
        %v420 = vld [vmem:[#allocation2 + $0x28] sm:$0xf]
        %v421 = vld [vmem:[#allocation2 + $0x2c] sm:$0xf]
        %v422 = vld [vmem:[#allocation2 + $0x30] sm:$0xf]
        %v423 = vld [vmem:[#allocation2 + $0x34] sm:$0xf]
        %v424 = vld [vmem:[#allocation2 + $0x38] sm:$0xf]
        %v425 = vld [vmem:[#allocation2 + $0x3c] sm:$0xf]
        %v426 = vld [vmem:[#allocation2 + $0x40] sm:$0xf]
        %v427 = vld [vmem:[#allocation2 + $0x44] sm:$0xf]
        %v428 = vld [vmem:[#allocation2 + $0x48] sm:$0xf]
        %v429 = vld [vmem:[#allocation2 + $0x4c] sm:$0xf]
        %v430 = vld [vmem:[#allocation2 + $0x50] sm:$0xf]
        %v431 = vld [vmem:[#allocation2 + $0x54] sm:$0xf]
        %v432 = vld [vmem:[#allocation2 + $0x58] sm:$0xf]
        %v433 = vld [vmem:[#allocation2 + $0x5c] sm:$0xf]
        %v434 = vld [vmem:[#allocation2 + $0x60] sm:$0xf]
        %v435 = vld [vmem:[#allocation2 + $0x64] sm:$0xf]
        %v436 = vld [vmem:[#allocation2 + $0x68] sm:$0xf]
        %v437 = vld [vmem:[#allocation2 + $0x6c] sm:$0xf]
        %v438 = vld [vmem:[#allocation2 + $0x70] sm:$0xf]
        %v439 = vld [vmem:[#allocation2 + $0x74] sm:$0xf]
        %v440 = vld [vmem:[#allocation2 + $0x78] sm:$0xf]
        %v441 = vld [vmem:[#allocation2 + $0x7c] sm:$0xf]
        %v442 = vld [vmem:[%s4] sm:$0x1]
        %v444 = vlaneseq
        %v445 = vshrl.u32 %v444, 7
        %v446 = vsub.s32 0, %v445
        %v447 = vrot.slane %v442, %v446
        %v481 = vunpack.c.l.b16 %v410
        %v482 = vunpack.c.l.b16 %v411
        %v483 = vunpack.c.l.b16 %v412
        %v484 = vunpack.c.l.b16 %v413
        %v485 = vunpack.c.l.b16 %v414
        %v486 = vunpack.c.l.b16 %v415
        %v487 = vunpack.c.l.b16 %v416
        %v488 = vunpack.c.l.b16 %v417
        %v489 = vunpack.c.l.b16 %v418
        %v490 = vunpack.c.l.b16 %v419
        %v491 = vunpack.c.l.b16 %v420
        %v492 = vunpack.c.l.b16 %v421
        %v493 = vunpack.c.l.b16 %v422
        %v494 = vunpack.c.l.b16 %v423
        %v495 = vunpack.c.l.b16 %v424
        %v496 = vunpack.c.l.b16 %v425
        %v497 = vunpack.c.l.b16 %v426
        %v498 = vunpack.c.l.b16 %v427
        %v499 = vunpack.c.l.b16 %v428
        %v500 = vunpack.c.l.b16 %v429
        %v501 = vunpack.c.l.b16 %v430
        %v502 = vunpack.c.l.b16 %v431
        %v503 = vunpack.c.l.b16 %v432
        %v504 = vunpack.c.l.b16 %v433
        %v505 = vunpack.c.l.b16 %v434
        %v506 = vunpack.c.l.b16 %v435
        %v507 = vunpack.c.l.b16 %v436
        %v508 = vunpack.c.l.b16 %v437
        %v509 = vunpack.c.l.b16 %v438
        %v510 = vunpack.c.l.b16 %v439
        %v511 = vunpack.c.l.b16 %v440
        %v512 = vunpack.c.l.b16 %v441
        %v513 = vpack.c.b16 %v482, %v481
        %v514 = vpack.c.b16 %v484, %v483
        %v515 = vpack.c.b16 %v486, %v485
        %v516 = vpack.c.b16 %v488, %v487
        %v517 = vpack.c.b16 %v490, %v489
        %v518 = vpack.c.b16 %v492, %v491
        %v519 = vpack.c.b16 %v494, %v493
        %v520 = vpack.c.b16 %v496, %v495
        %v521 = vpack.c.b16 %v498, %v497
        %v522 = vpack.c.b16 %v500, %v499
        %v523 = vpack.c.b16 %v502, %v501
        %v524 = vpack.c.b16 %v504, %v503
        %v525 = vpack.c.b16 %v506, %v505
        %v526 = vpack.c.b16 %v508, %v507
        %v527 = vpack.c.b16 %v510, %v509
        %v528 = vpack.c.b16 %v512, %v511
        %545 = vmatprep.subr.bf16.mxu0 0
        %546 = vmatpush1.bf16.msra.mxu0 %v513
        %547 = vmatprep.subr.bf16.mxu0 0
        %548 = vmatpush1.bf16.msra.mxu0 %v514
        %549 = vmatprep.subr.bf16.mxu0 0
        %550 = vmatpush1.bf16.msra.mxu0 %v515
        %551 = vmatprep.subr.bf16.mxu0 0
        %552 = vmatpush1.bf16.msra.mxu0 %v516
        %553 = vmatprep.subr.bf16.mxu0 0
        %554 = vmatpush1.bf16.msra.mxu0 %v517
        %555 = vmatprep.subr.bf16.mxu0 0
        %556 = vmatpush1.bf16.msra.mxu0 %v518
        %557 = vmatprep.subr.bf16.mxu0 0
        %558 = vmatpush1.bf16.msra.mxu0 %v519
        %559 = vmatprep.subr.bf16.mxu0 0
        %560 = vmatpush1.bf16.msra.mxu0 %v520
        %561 = vmatprep.subr.bf16.mxu0 0
        %562 = vmatpush1.bf16.msra.mxu0 %v521
        %563 = vmatprep.subr.bf16.mxu0 0
        %564 = vmatpush1.bf16.msra.mxu0 %v522
        %565 = vmatprep.subr.bf16.mxu0 0
        %566 = vmatpush1.bf16.msra.mxu0 %v523
        %567 = vmatprep.subr.bf16.mxu0 0
        %568 = vmatpush1.bf16.msra.mxu0 %v524
        %569 = vmatprep.subr.bf16.mxu0 0
        %570 = vmatpush1.bf16.msra.mxu0 %v525
        %571 = vmatprep.subr.bf16.mxu0 0
        %572 = vmatpush1.bf16.msra.mxu0 %v526
        %573 = vmatprep.subr.bf16.mxu0 0
        %574 = vmatpush1.bf16.msra.mxu0 %v527
        %575 = vmatprep.subr.bf16.mxu0 0
        %576 = vmatpush1.bf16.msra.mxu0 %v528
        %577 = vmatprep.mubr.bf16.mxu0 %v407
        %578 = vmatmul.mubr.bf16.gmra.mrb[0].mxu0 %v406
        %v579 = vpop.f32.mrb[0].mxu0
        %v580 = vadd.f32 %v447, %v579
        %v581 = vpop.f32.mrb[0].mxu0
        %v582 = vpop.f32.mrb[0].mxu0
        %v583 = vadd.f32 %v447, %v582
        %v584 = vpop.f32.mrb[0].mxu0
        %585 = vmatprep.mubr.bf16.mxu0 %v409
        %586 = vmatmul.mubr.bf16.gmra.mrb[0].mxu0 %v408
        %v587 = vpop.f32.mrb[0].mxu0
        %v588 = vadd.f32 %v447, %v587
        %v589 = vpop.f32.mrb[0].mxu0
        %v590 = vpop.f32.mrb[0].mxu0
        %v591 = vadd.f32 %v447, %v590
        %v592 = vpop.f32.mrb[0].mxu0
        %593 = vdwg.mxu0
        %v594 = vmax.f32 %v580, 0.0
        %v595 = vmax.f32 %v583, 0.0
        %v596 = vmax.f32 %v588, 0.0
        %v597 = vmax.f32 %v591, 0.0
        %v598 = vpack.c.bf16 %v595, %v594
        %v599 = vpack.c.bf16 %v597, %v596
        %v600 = vld [vmem:[%s5] sm:$0xf]
        %v601 = vld [vmem:[%s5 + $0x4] sm:$0xf]
        %v602 = vld [vmem:[%s5 + $0x8] sm:$0xf]
        %v603 = vld [vmem:[%s5 + $0xc] sm:$0xf]
        %v604 = vld [vmem:[%s5 + $0x10] sm:$0xf]
        %v605 = vld [vmem:[%s5 + $0x14] sm:$0xf]
        %v606 = vld [vmem:[%s5 + $0x18] sm:$0xf]
        %v607 = vld [vmem:[%s5 + $0x1c] sm:$0xf]
        %v608 = vld [vmem:[%s5 + $0x20] sm:$0xf]
        %v609 = vld [vmem:[%s5 + $0x24] sm:$0xf]
        %v610 = vld [vmem:[%s5 + $0x28] sm:$0xf]
        %v611 = vld [vmem:[%s5 + $0x2c] sm:$0xf]
        %v612 = vld [vmem:[%s5 + $0x30] sm:$0xf]
        %v613 = vld [vmem:[%s5 + $0x34] sm:$0xf]
        %v614 = vld [vmem:[%s5 + $0x38] sm:$0xf]
        %v615 = vld [vmem:[%s5 + $0x3c] sm:$0xf]
        %v616 = vld [vmem:[%s6] sm:$0x1]
        %v618 = vlaneseq
        %v619 = vshrl.u32 %v618, 7
        %v620 = vsub.s32 0, %v619
        %v621 = vrot.slane %v616, %v620
        %v639 = vunpack.c.l.b16 %v600
        %v640 = vunpack.c.l.b16 %v601
        %v641 = vunpack.c.l.b16 %v602
        %v642 = vunpack.c.l.b16 %v603
        %v643 = vunpack.c.l.b16 %v604
        %v644 = vunpack.c.l.b16 %v605
        %v645 = vunpack.c.l.b16 %v606
        %v646 = vunpack.c.l.b16 %v607
        %v647 = vunpack.c.l.b16 %v608
        %v648 = vunpack.c.l.b16 %v609
        %v649 = vunpack.c.l.b16 %v610
        %v650 = vunpack.c.l.b16 %v611
        %v651 = vunpack.c.l.b16 %v612
        %v652 = vunpack.c.l.b16 %v613
        %v653 = vunpack.c.l.b16 %v614
        %v654 = vunpack.c.l.b16 %v615
        %v655 = vpack.c.b16 %v640, %v639
        %v656 = vpack.c.b16 %v642, %v641
        %v657 = vpack.c.b16 %v644, %v643
        %v658 = vpack.c.b16 %v646, %v645
        %v659 = vpack.c.b16 %v648, %v647
        %v660 = vpack.c.b16 %v650, %v649
        %v661 = vpack.c.b16 %v652, %v651
        %v662 = vpack.c.b16 %v654, %v653
        %671 = vmatprep.subr.bf16.mxu0 0
        %672 = vmatpush1.bf16.msra.mxu0 %v655
        %673 = vmatprep.subr.bf16.mxu0 0
        %674 = vmatpush1.bf16.msra.mxu0 %v656
        %675 = vmatprep.subr.bf16.mxu0 0
        %676 = vmatpush1.bf16.msra.mxu0 %v657
        %677 = vmatprep.subr.bf16.mxu0 0
        %678 = vmatpush1.bf16.msra.mxu0 %v658
        %679 = vmatprep.subr.bf16.mxu0 0
        %680 = vmatpush1.bf16.msra.mxu0 %v659
        %681 = vmatprep.subr.bf16.mxu0 0
        %682 = vmatpush1.bf16.msra.mxu0 %v660
        %683 = vmatprep.subr.bf16.mxu0 0
        %684 = vmatpush1.bf16.msra.mxu0 %v661
        %685 = vmatprep.subr.bf16.mxu0 0
        %686 = vmatpush1.bf16.msra.mxu0 %v662
        %687 = vmatprep.subr.bf16.mxu0 0
        %688 = vmatpush1.bf16.msra.mxu0 0
        %689 = vmatprep.subr.bf16.mxu0 0
        %690 = vmatpush1.bf16.msra.mxu0 0
        %691 = vmatprep.subr.bf16.mxu0 0
        %692 = vmatpush1.bf16.msra.mxu0 0
        %693 = vmatprep.subr.bf16.mxu0 0
        %694 = vmatpush1.bf16.msra.mxu0 0
        %695 = vmatprep.subr.bf16.mxu0 0
        %696 = vmatpush1.bf16.msra.mxu0 0
        %697 = vmatprep.subr.bf16.mxu0 0
        %698 = vmatpush1.bf16.msra.mxu0 0
        %699 = vmatprep.subr.bf16.mxu0 0
        %700 = vmatpush1.bf16.msra.mxu0 0
        %701 = vmatprep.subr.bf16.mxu0 0
        %702 = vmatpush1.bf16.msra.mxu0 0
        %703 = vmatprep.mubr.bf16.mxu0 0
        %704 = vmatmul.mubr.bf16.gmra.mrb[0].mxu0 %v598
        %v705 = vpop.f32.mrb[0].mxu0
        %v706 = vadd.f32 %v621, %v705
        %v707 = vpop.f32.mrb[0].mxu0
        %v708 = vpop.f32.mrb[0].mxu0
        %v709 = vadd.f32 %v621, %v708
        %v710 = vpop.f32.mrb[0].mxu0
        %711 = vmatprep.mubr.bf16.mxu0 0
        %712 = vmatmul.mubr.bf16.gmra.mrb[0].mxu0 %v599
        %v713 = vpop.f32.mrb[0].mxu0
        %v714 = vadd.f32 %v621, %v713
        %v715 = vpop.f32.mrb[0].mxu0
        %v716 = vpop.f32.mrb[0].mxu0
        %v717 = vadd.f32 %v621, %v716
        %v718 = vpop.f32.mrb[0].mxu0
        %719 = vdwg.mxu0
        %720 = vst [vmem:[%s287] sm:$0xff] %v706
        %721 = vst [vmem:[%s287 + $0x8] sm:$0xff] %v709
        %722 = vst [vmem:[%s287 + $0x10] sm:$0xff] %v714
        %723 = vst [vmem:[%s287 + $0x18] sm:$0xff] %v717
        %s724 = sand.u32 %s182, 1
        %s725 = scalar_lea.sflag [#allocation4], %s724
        %s726 = sand.u32 %s182, 1
        %s727 = smul.addr %s726, 32
        %s728 = scalar_lea.vmem [#allocation5], %s727
        // Predicated region
        $region53: #{tpu_custom_call.1} parent=47 // pred_check
          %p729 = pneg %p192
        $region54: #{tpu_custom_call.1} parent=47 // pred_check_branch
          %731 = sbr.rel (%p729) target = $region56
        $region55: #{tpu_custom_call.1} parent=47 // pred_region
          %s732 = smul.u32 4, %s22
          %s734 = ssub.s32 512, 512
          %735 = vsyncadd %s725, %s734
          %s736 = smul.addr %s732, 128
          %s737 = scalar_lea.hbm %s7, %s736
          %s738 = sshll.u32 %s728, 4
          %s739 = int_to_ptr.vmem [resolvable:$true] %s738
          %744 = dma.vmem_to_hbm [thread:$0]  %s739, 512, %s737, %s725, 128, 128, 8
        $region56: #{tpu_custom_call.1} parent=47 // pred_fallthru
          _
      $region48: #{tpu_custom_call.1} parent=5 // pred_fallthru
        _
      %p745 = scmp.le.s32.totalorder 2, %s17
      // Predicated region
      $region57: #{tpu_custom_call.1} parent=5 // pred_check
        %p746 = pneg %p745
      $region58: #{tpu_custom_call.1} parent=5 // pred_check_branch
        %748 = sbr.rel (%p746) target = $region60
      $region59: #{tpu_custom_call.1} parent=5 // pred_region
        %s749 = ssub.s32 %s17, 2
        // Predicated region
        $region61: #{tpu_custom_call.1} parent=59 // pred_check
          %p750 = pneg %p198
        $region62: #{tpu_custom_call.1} parent=59 // pred_check_branch
          %752 = sbr.rel (%p750) target = $region64
        $region63: #{tpu_custom_call.1} parent=59 // pred_region
          %s753 = sand.u32 %s183, 1
          %s754 = scalar_lea.sflag [#allocation4], %s753
          %s755 = sand.u32 %s183, 1
          %s756 = smul.addr %s755, 32
          %s757 = scalar_lea.vmem [#allocation5], %s756
          %758 = dma.done %s754, 512
        $region64: #{tpu_custom_call.1} parent=59 // pred_fallthru
          _
      $region60: #{tpu_custom_call.1} parent=5 // pred_fallthru
        _
    $region6: #{tpu_custom_call.1} parent=1 // loop_footer
      %s21 = sadd.s32 1, %s17
    $region7: #{tpu_custom_call.1} parent=1 // loop_footer_branch
      %16 = sbr.rel target = $region3
    $region8: #{tpu_custom_call.1} parent=1 // loop_exit
      _
    %759 = vsyncpa [#allocation3], 1
    %s760 = scalar_lea.sflag [#allocation3], 1
    %761 = vsyncpa %s760, 1
    %762 = vsyncpa [#allocation4], 1
    %s763 = scalar_lea.sflag [#allocation4], 1
    %764 = vsyncpa %s763, 1

// kernel: tpu_custom_call.1
$region0: #{tpu_custom_call.1}
  #allocation0 [shape = 'u32[]', space=smem, size = 0x4, offset = 0x4, fixed_abs, tag = 'smem constant byte address 0x4 - core index']
  #allocation1 [shape = 'u32[144,128]{1,0:T(1,128)}', space=vmem, size = 0x12000, scoped, tag = 'internal scratch']
  %s0 = inlined_call_operand.vmem [shape: f32[64,32], index: 0, kind: input, shape index: {}]
  %s1 = inlined_call_operand.vmem [shape: bf16[32,256], index: 1, kind: input, shape index: {}]
  %s2 = inlined_call_operand.vmem [shape: f32[1,256], index: 2, kind: input, shape index: {}]
  %s3 = inlined_call_operand.hbm [shape: bf16[256,128], index: 3, kind: input, shape index: {}]
  %s4 = inlined_call_operand.vmem [shape: f32[1,128], index: 4, kind: input, shape index: {}]
  %s5 = inlined_call_operand.vmem [shape: bf16[128,128], index: 5, kind: input, shape index: {}]
  %s6 = inlined_call_operand.vmem [shape: f32[1,128], index: 6, kind: input, shape index: {}]
  %s7 = inlined_call_operand.hbm [shape: f32[64,128], index: 7, kind: output, shape index: {}]
  %s8 = sld [smem:[#allocation0]]
  $region65: #{tpu_custom_call.1} parent=0
    _
  %s10 = ssub.s32 1, %s8
  %s11 = scalar_select 0, %s10, %s8
  $region1: #{tpu_custom_call.1} parent=0
    #allocation2 [shape = 'u8[65536]{0}', space=vmem, size = 0x10000, scoped, tag = 'input window, operand 3, single buffered']
    #allocation3 [shape = 's32[2]{0}', space=sflag, size = 0x8, scoped, tag = 'scoped memory for tpu_custom_call.1']
    #allocation4 [shape = 's32[2]{0}', space=sflag, size = 0x8, scoped, tag = 'scoped memory for tpu_custom_call.1']
    #allocation5 [shape = 'u8[32768]{0}', space=vmem, size = 0x8000, scoped, tag = 'output window, operand 0']
    %12 = vsyncpa [#allocation3], 0
    %13 = vsyncpa [#allocation4], 0
    %s14 = scalar_lea.sflag [#allocation4], 1
    %15 = vsyncpa %s14, 0
    loop: start=0, step=1, limit=4
    $region2: #{tpu_custom_call.1} parent=1 // loop_pre_header
      _
    $region3: #{tpu_custom_call.1} parent=1 // loop_header
      %s17 = sphi 0, %s21
      %p18 = scmp.ge.s32.totalorder %s17, 4
      %s27 = sphi 0, %s29
      %s30 = sphi 0, %s27
      %s31 = sphi 0, %s30
      %s47 = sphi 0, %s31
      %s51 = sphi 0, %s51
      %s53 = sphi 0, %s51
      %s54 = sphi 0, %s53
      %s68 = sphi 0, %s54
      %s72 = sphi 0, %s72
      %s74 = sphi 0, %s72
      %s75 = sphi 0, %s74
      %s89 = sphi 0, %s75
      %s93 = sphi 0, %s93
      %s95 = sphi 0, %s93
      %s96 = sphi 0, %s95
      %s110 = sphi 0, %s96
      %s114 = sphi 0, %s114
      %s116 = sphi 0, %s114
      %s117 = sphi 0, %s116
      %s131 = sphi 0, %s117
      %s135 = sphi 0, %s135
      %s137 = sphi 0, %s135
      %s138 = sphi 0, %s137
      %s152 = sphi 0, %s138
      %s156 = sphi 0, %s156
      %s158 = sphi 0, %s156
      %s159 = sphi 0, %s158
      %s173 = sphi 0, %s159
      %s179 = sphi 0, %s181
      %s182 = sphi 0, %s179
      %s183 = sphi 0, %s182
      %s199 = sphi 0, %s183
    $region4: #{tpu_custom_call.1} parent=1 // loop_header_branch
      %20 = sbr.rel (%p18) target = $region8
    $region5: #{tpu_custom_call.1} parent=1 // loop_body
      %s22 = ssub.s32 %s17, 1
      %s23 = ssub.s32 %s17, 2
      %s24 = sadd.s32 %s17, 1
      %s25 = ssub.s32 %s17, %s24
      %p26 = scmp.eq.s32.totalorder %s25, 0
      %s28 = sadd.s32 %s27, 1
      %s29 = scalar_select %p26, %s27, %s28
      %p32 = pneg %p26
      %p33 = scmp.eq.s32.totalorder %s17, 1
      %p34 = por %p32, %p33
      %p35 = scmp.ne.s32.totalorder %s27, %s30
      %p36 = scmp.eq.s32.totalorder %s17, 0
      %p37 = por %p35, %p36
      %p38 = scmp.ne.s32.totalorder %s27, %s30
      %p39 = scmp.eq.s32.totalorder %s22, 1
      %p40 = por %p38, %p39
      %p41 = scmp.ne.s32.totalorder %s30, %s31
      %p42 = scmp.eq.s32.totalorder %s22, 0
      %p43 = por %p41, %p42
      %p44 = scmp.ne.s32.totalorder %s30, %s31
      %p45 = scmp.eq.s32.totalorder %s23, 1
      %p46 = por %p44, %p45
      %p48 = scmp.ne.s32.totalorder %s31, %s47
      %p49 = scmp.eq.s32.totalorder %s23, 0
      %p50 = por %p48, %p49
      %s52 = sadd.s32 %s51, 1
      %p55 = scmp.eq.s32.totalorder %s17, 1
      %p56 = scmp.ne.s32.totalorder %s51, %s53
      %p57 = scmp.eq.s32.totalorder %s17, 0
      %p58 = por %p56, %p57
      %p59 = scmp.ne.s32.totalorder %s51, %s53
      %p60 = scmp.eq.s32.totalorder %s22, 1
      %p61 = por %p59, %p60
      %p62 = scmp.ne.s32.totalorder %s53, %s54
      %p63 = scmp.eq.s32.totalorder %s22, 0
      %p64 = por %p62, %p63
      %p65 = scmp.ne.s32.totalorder %s53, %s54
      %p66 = scmp.eq.s32.totalorder %s23, 1
      %p67 = por %p65, %p66
      %p69 = scmp.ne.s32.totalorder %s54, %s68
      %p70 = scmp.eq.s32.totalorder %s23, 0
      %p71 = por %p69, %p70
      %s73 = sadd.s32 %s72, 1
      %p76 = scmp.eq.s32.totalorder %s17, 1
      %p77 = scmp.ne.s32.totalorder %s72, %s74
      %p78 = scmp.eq.s32.totalorder %s17, 0
      %p79 = por %p77, %p78
      %p80 = scmp.ne.s32.totalorder %s72, %s74
      %p81 = scmp.eq.s32.totalorder %s22, 1
      %p82 = por %p80, %p81
      %p83 = scmp.ne.s32.totalorder %s74, %s75
      %p84 = scmp.eq.s32.totalorder %s22, 0
      %p85 = por %p83, %p84
      %p86 = scmp.ne.s32.totalorder %s74, %s75
      %p87 = scmp.eq.s32.totalorder %s23, 1
      %p88 = por %p86, %p87
      %p90 = scmp.ne.s32.totalorder %s75, %s89
      %p91 = scmp.eq.s32.totalorder %s23, 0
      %p92 = por %p90, %p91
      %s94 = sadd.s32 %s93, 1
      %p97 = scmp.eq.s32.totalorder %s17, 1
      %p98 = scmp.ne.s32.totalorder %s93, %s95
      %p99 = scmp.eq.s32.totalorder %s17, 0
      %p100 = por %p98, %p99
      %p101 = scmp.ne.s32.totalorder %s93, %s95
      %p102 = scmp.eq.s32.totalorder %s22, 1
      %p103 = por %p101, %p102
      %p104 = scmp.ne.s32.totalorder %s95, %s96
      %p105 = scmp.eq.s32.totalorder %s22, 0
      %p106 = por %p104, %p105
      %p107 = scmp.ne.s32.totalorder %s95, %s96
      %p108 = scmp.eq.s32.totalorder %s23, 1
      %p109 = por %p107, %p108
      %p111 = scmp.ne.s32.totalorder %s96, %s110
      %p112 = scmp.eq.s32.totalorder %s23, 0
      %p113 = por %p111, %p112
      %s115 = sadd.s32 %s114, 1
      %p118 = scmp.eq.s32.totalorder %s17, 1
      %p119 = scmp.ne.s32.totalorder %s114, %s116
      %p120 = scmp.eq.s32.totalorder %s17, 0
      %p121 = por %p119, %p120
      %p122 = scmp.ne.s32.totalorder %s114, %s116
      %p123 = scmp.eq.s32.totalorder %s22, 1
      %p124 = por %p122, %p123
      %p125 = scmp.ne.s32.totalorder %s116, %s117
      %p126 = scmp.eq.s32.totalorder %s22, 0
      %p127 = por %p125, %p126
      %p128 = scmp.ne.s32.totalorder %s116, %s117
      %p129 = scmp.eq.s32.totalorder %s23, 1
      %p130 = por %p128, %p129
      %p132 = scmp.ne.s32.totalorder %s117, %s131
      %p133 = scmp.eq.s32.totalorder %s23, 0
      %p134 = por %p132, %p133
      %s136 = sadd.s32 %s135, 1
      %p139 = scmp.eq.s32.totalorder %s17, 1
      %p140 = scmp.ne.s32.totalorder %s135, %s137
      %p141 = scmp.eq.s32.totalorder %s17, 0
      %p142 = por %p140, %p141
      %p143 = scmp.ne.s32.totalorder %s135, %s137
      %p144 = scmp.eq.s32.totalorder %s22, 1
      %p145 = por %p143, %p144
      %p146 = scmp.ne.s32.totalorder %s137, %s138
      %p147 = scmp.eq.s32.totalorder %s22, 0
      %p148 = por %p146, %p147
      %p149 = scmp.ne.s32.totalorder %s137, %s138
      %p150 = scmp.eq.s32.totalorder %s23, 1
      %p151 = por %p149, %p150
      %p153 = scmp.ne.s32.totalorder %s138, %s152
      %p154 = scmp.eq.s32.totalorder %s23, 0
      %p155 = por %p153, %p154
      %s157 = sadd.s32 %s156, 1
      %p160 = scmp.eq.s32.totalorder %s17, 1
      %p161 = scmp.ne.s32.totalorder %s156, %s158
      %p162 = scmp.eq.s32.totalorder %s17, 0
      %p163 = por %p161, %p162
      %p164 = scmp.ne.s32.totalorder %s156, %s158
      %p165 = scmp.eq.s32.totalorder %s22, 1
      %p166 = por %p164, %p165
      %p167 = scmp.ne.s32.totalorder %s158, %s159
      %p168 = scmp.eq.s32.totalorder %s22, 0
      %p169 = por %p167, %p168
      %p170 = scmp.ne.s32.totalorder %s158, %s159
      %p171 = scmp.eq.s32.totalorder %s23, 1
      %p172 = por %p170, %p171
      %p174 = scmp.ne.s32.totalorder %s159, %s173
      %p175 = scmp.eq.s32.totalorder %s23, 0
      %p176 = por %p174, %p175
      %s177 = ssub.s32 %s17, %s24
      %p178 = scmp.eq.s32.totalorder %s177, 0
      %s180 = sadd.s32 %s179, 1
      %s181 = scalar_select %p178, %s179, %s180
      %p184 = pneg %p178
      %p185 = scmp.eq.s32.totalorder %s17, 1
      %p186 = por %p184, %p185
      %p187 = scmp.ne.s32.totalorder %s179, %s182
      %p188 = scmp.eq.s32.totalorder %s17, 0
      %p189 = por %p187, %p188
      %p190 = scmp.ne.s32.totalorder %s179, %s182
      %p191 = scmp.eq.s32.totalorder %s22, 1
      %p192 = por %p190, %p191
      %p193 = scmp.ne.s32.totalorder %s182, %s183
      %p194 = scmp.eq.s32.totalorder %s22, 0
      %p195 = por %p193, %p194
      %p196 = scmp.ne.s32.totalorder %s182, %s183
      %p197 = scmp.eq.s32.totalorder %s23, 1
      %p198 = por %p196, %p197
      %p200 = scmp.ne.s32.totalorder %s183, %s199
      %p201 = scmp.eq.s32.totalorder %s23, 0
      %p202 = por %p200, %p201
      %p203 = scmp.le.s32.totalorder 1, %s17
      %p204 = scmp.lt.s32.totalorder %s17, 3
      %p205 = pnand %p203, %p204
      %p206 = pneg %p205
      // Predicated region
      $region9: #{tpu_custom_call.1} parent=5 // pred_check
        _
      $region10: #{tpu_custom_call.1} parent=5 // pred_check_branch
        %208 = sbr.rel (%p205) target = $region12
      $region11: #{tpu_custom_call.1} parent=5 // pred_region
        %s209 = ssub.s32 %s17, 1
        // Predicated region
        $region13: #{tpu_custom_call.1} parent=11 // pred_check
          %p210 = pneg %p64
        $region14: #{tpu_custom_call.1} parent=11 // pred_check_branch
          %212 = sbr.rel (%p210) target = $region16
        $region15: #{tpu_custom_call.1} parent=11 // pred_region
          _
        $region16: #{tpu_custom_call.1} parent=11 // pred_fallthru
          _
        // Predicated region
        $region17: #{tpu_custom_call.1} parent=11 // pred_check
          %p213 = pneg %p85
        $region18: #{tpu_custom_call.1} parent=11 // pred_check_branch
          %215 = sbr.rel (%p213) target = $region20
        $region19: #{tpu_custom_call.1} parent=11 // pred_region
          _
        $region20: #{tpu_custom_call.1} parent=11 // pred_fallthru
          _
        // Predicated region
        $region21: #{tpu_custom_call.1} parent=11 // pred_check
          %p216 = pneg %p106
        $region22: #{tpu_custom_call.1} parent=11 // pred_check_branch
          %218 = sbr.rel (%p216) target = $region24
        $region23: #{tpu_custom_call.1} parent=11 // pred_region
          %s220 = ssub.s32 2048, 2048
          %221 = vsyncadd [#allocation3], %s220
          %s222 = sshll.u32 [#allocation2], 4
          %s223 = int_to_ptr.vmem [resolvable:$true] %s222
          %228 = dma.hbm_to_vmem [thread:$0]  %s3, 2048, %s223, [#allocation3], 64, 64, 4
        $region24: #{tpu_custom_call.1} parent=11 // pred_fallthru
          _
        // Predicated region
        $region25: #{tpu_custom_call.1} parent=11 // pred_check
          %p229 = pneg %p127
        $region26: #{tpu_custom_call.1} parent=11 // pred_check_branch
          %231 = sbr.rel (%p229) target = $region28
        $region27: #{tpu_custom_call.1} parent=11 // pred_region
          _
        $region28: #{tpu_custom_call.1} parent=11 // pred_fallthru
          _
        // Predicated region
        $region29: #{tpu_custom_call.1} parent=11 // pred_check
          %p232 = pneg %p148
        $region30: #{tpu_custom_call.1} parent=11 // pred_check_branch
          %234 = sbr.rel (%p232) target = $region32
        $region31: #{tpu_custom_call.1} parent=11 // pred_region
          _
        $region32: #{tpu_custom_call.1} parent=11 // pred_fallthru
          _
        // Predicated region
        $region33: #{tpu_custom_call.1} parent=11 // pred_check
          %p235 = pneg %p169
        $region34: #{tpu_custom_call.1} parent=11 // pred_check_branch
          %237 = sbr.rel (%p235) target = $region36
        $region35: #{tpu_custom_call.1} parent=11 // pred_region
          _
        $region36: #{tpu_custom_call.1} parent=11 // pred_fallthru
          _
      $region12: #{tpu_custom_call.1} parent=5 // pred_fallthru
        _
      %p238 = scmp.lt.s32.totalorder %s17, 2
      // Predicated region
      $region37: #{tpu_custom_call.1} parent=5 // pred_check
        %p239 = pneg %p238
      $region38: #{tpu_custom_call.1} parent=5 // pred_check_branch
        %241 = sbr.rel (%p239) target = $region40
      $region39: #{tpu_custom_call.1} parent=5 // pred_region
        // Predicated region
        $region41: #{tpu_custom_call.1} parent=39 // pred_check
          %p242 = pneg %p37
        $region42: #{tpu_custom_call.1} parent=39 // pred_check_branch
          %244 = sbr.rel (%p242) target = $region44
        $region43: #{tpu_custom_call.1} parent=39 // pred_region
          %s245 = smul.u32 4, %s17
          %p246 = scmp.lt.s32.totalorder %s245, 7
          %s247 = scalar_select %p246, %s245, 7
          %s248 = smul.addr %s247, 8
          %s249 = scalar_lea.vmem %s0, %s248
          %s250 = smul.u32 4, %s17
        $region44: #{tpu_custom_call.1} parent=39 // pred_fallthru
          _
      $region40: #{tpu_custom_call.1} parent=5 // pred_fallthru
        _
      %p251 = scmp.le.s32.totalorder 1, %s17
      %p252 = scmp.lt.s32.totalorder %s17, 3
      %p253 = pnand %p251, %p252
      %p254 = pneg %p253
      // Predicated region
      $region45: #{tpu_custom_call.1} parent=5 // pred_check
        _
      $region46: #{tpu_custom_call.1} parent=5 // pred_check_branch
        %256 = sbr.rel (%p253) target = $region48
      $region47: #{tpu_custom_call.1} parent=5 // pred_region
        %s257 = ssub.s32 %s17, 1
        // Predicated region
        $region49: #{tpu_custom_call.1} parent=47 // pred_check
          %p258 = pneg %p106
        $region50: #{tpu_custom_call.1} parent=47 // pred_check_branch
          %260 = sbr.rel (%p258) target = $region52
        $region51: #{tpu_custom_call.1} parent=47 // pred_region
          %261 = dma.done [#allocation3], 2048
        $region52: #{tpu_custom_call.1} parent=47 // pred_fallthru
          _
        %s262 = smul.u32 4, %s22
        %p263 = scmp.lt.s32.totalorder %s262, 7
        %s264 = scalar_select %p263, %s262, 7
        %s265 = smul.addr %s264, 8
        %s266 = scalar_lea.vmem %s0, %s265
        %p267 = pneg %p43
        %p268 = pneg %p40
        %p269 = pneg %p64
        %p270 = pneg %p61
        %p271 = pneg %p85
        %p272 = pneg %p82
        %p273 = pneg %p106
        %p274 = pneg %p103
        %p275 = pneg %p127
        %p276 = pneg %p124
        %p277 = pneg %p148
        %p278 = pneg %p145
        %p279 = pneg %p169
        %p280 = pneg %p166
        %p281 = pneg %p195
        %p282 = pneg %p192
        %s283 = sand.u32 %s182, 1
        %s284 = scalar_lea.sflag [#allocation4], %s283
        %s285 = sand.u32 %s182, 1
        %s286 = smul.addr %s285, 32
        %s287 = scalar_lea.vmem [#allocation5], %s286
        %s288 = smul.u32 4, %s22
        %p289 = scmp.lt.s32.totalorder %s288, 7
        %s290 = scalar_select %p289, %s288, 7
        %s291 = smul.addr %s290, 8
        %s292 = scalar_lea.vmem %s0, %s291
        %s293 = smul.u32 4, %s22
        %s294 = smul.u32 4, %s22
        %v296 = vld [vmem:[%s292] sm:$0xff]
        %v297 = vld [vmem:[%s292 + $0x8] sm:$0xff]
        %v298 = vld [vmem:[%s292 + $0x10] sm:$0xff]
        %v299 = vld [vmem:[%s292 + $0x18] sm:$0xff]
        %v300 = vpack.c.bf16 %v297, %v296
        %v301 = vpack.c.bf16 %v299, %v298
        %v302 = vld [vmem:[%s1] sm:$0xff]
        %v303 = vld [vmem:[%s1 + $0x8] sm:$0xff]
        %v304 = vld [vmem:[%s1 + $0x10] sm:$0xff]
        %v305 = vld [vmem:[%s1 + $0x18] sm:$0xff]
        %v306 = vld [vmem:[%s2] sm:$0x3]
        %v308 = vlaneseq
        %v309 = vshrl.u32 %v308, 7
        %v310 = vsub.s32 0, %v309
        %v311 = vrot.slane %v306, %v310
        %v312 = vlaneseq
        %v313 = vshrl.u32 %v312, 7
        %v314 = vsub.s32 1, %v313
        %v315 = vrot.slane %v306, %v314
        %v322 = vunpack.c.l.b16 %v302
        %v323 = vunpack.c.h.b16 %v302
        %v324 = vunpack.c.l.b16 %v303
        %v325 = vunpack.c.h.b16 %v303
        %v326 = vunpack.c.l.b16 %v304
        %v327 = vunpack.c.h.b16 %v304
        %v328 = vunpack.c.l.b16 %v305
        %v329 = vunpack.c.h.b16 %v305
        %v330 = vpack.c.b16 %v324, %v322
        %v331 = vpack.c.b16 %v325, %v323
        %v332 = vpack.c.b16 %v328, %v326
        %v333 = vpack.c.b16 %v329, %v327
        %vm338 = vcmask 261120
        %v340 = vsel %vm338, %v300, 0
        %v343 = vsel %vm338, %v301, 0
        %345 = vmatprep.subr.bf16.mxu0 %v331
        %346 = vmatpush1.bf16.msra.mxu0 %v330
        %347 = vmatprep.subr.bf16.mxu0 %v333
        %348 = vmatpush1.bf16.msra.mxu0 %v332
        %349 = vmatprep.subr.bf16.mxu0 0
        %350 = vmatpush1.bf16.msra.mxu0 0
        %351 = vmatprep.subr.bf16.mxu0 0
        %352 = vmatpush1.bf16.msra.mxu0 0
        %353 = vmatprep.subr.bf16.mxu0 0
        %354 = vmatpush1.bf16.msra.mxu0 0
        %355 = vmatprep.subr.bf16.mxu0 0
        %356 = vmatpush1.bf16.msra.mxu0 0
        %357 = vmatprep.subr.bf16.mxu0 0
        %358 = vmatpush1.bf16.msra.mxu0 0
        %359 = vmatprep.subr.bf16.mxu0 0
        %360 = vmatpush1.bf16.msra.mxu0 0
        %361 = vmatprep.subr.bf16.mxu0 0
        %362 = vmatpush1.bf16.msra.mxu0 0
        %363 = vmatprep.subr.bf16.mxu0 0
        %364 = vmatpush1.bf16.msra.mxu0 0
        %365 = vmatprep.subr.bf16.mxu0 0
        %366 = vmatpush1.bf16.msra.mxu0 0
        %367 = vmatprep.subr.bf16.mxu0 0
        %368 = vmatpush1.bf16.msra.mxu0 0
        %369 = vmatprep.subr.bf16.mxu0 0
        %370 = vmatpush1.bf16.msra.mxu0 0
        %371 = vmatprep.subr.bf16.mxu0 0
        %372 = vmatpush1.bf16.msra.mxu0 0
        %373 = vmatprep.subr.bf16.mxu0 0
        %374 = vmatpush1.bf16.msra.mxu0 0
        %375 = vmatprep.subr.bf16.mxu0 0
        %376 = vmatpush1.bf16.msra.mxu0 0
        %377 = vmatprep.mubr.bf16.mxu0 0
        %378 = vmatmul.mubr.bf16.gmra.mrb[0].mxu0 %v340
        %v379 = vpop.f32.mrb[0].mxu0
        %v380 = vadd.f32 %v311, %v379
        %v381 = vpop.f32.mrb[0].mxu0
        %v382 = vadd.f32 %v315, %v381
        %v383 = vpop.f32.mrb[0].mxu0
        %v384 = vadd.f32 %v311, %v383
        %v385 = vpop.f32.mrb[0].mxu0
        %v386 = vadd.f32 %v315, %v385
        %387 = vmatprep.mubr.bf16.mxu0 0
        %388 = vmatmul.mubr.bf16.gmra.mrb[0].mxu0 %v343
        %v389 = vpop.f32.mrb[0].mxu0
        %v390 = vadd.f32 %v311, %v389
        %v391 = vpop.f32.mrb[0].mxu0
        %v392 = vadd.f32 %v315, %v391
        %v393 = vpop.f32.mrb[0].mxu0
        %v394 = vadd.f32 %v311, %v393
        %v395 = vpop.f32.mrb[0].mxu0
        %v396 = vadd.f32 %v315, %v395
        %397 = vdwg.mxu0
        %v398 = vmax.f32 %v380, 0.0
        %v399 = vmax.f32 %v382, 0.0
        %v400 = vmax.f32 %v384, 0.0
        %v401 = vmax.f32 %v386, 0.0
        %v402 = vmax.f32 %v390, 0.0
        %v403 = vmax.f32 %v392, 0.0
        %v404 = vmax.f32 %v394, 0.0
        %v405 = vmax.f32 %v396, 0.0
        %v406 = vpack.c.bf16 %v400, %v398
        %v407 = vpack.c.bf16 %v401, %v399
        %v408 = vpack.c.bf16 %v404, %v402
        %v409 = vpack.c.bf16 %v405, %v403
        %v410 = vld [vmem:[#allocation2] sm:$0xf]
        %v411 = vld [vmem:[#allocation2 + $0x4] sm:$0xf]
        %v412 = vld [vmem:[#allocation2 + $0x8] sm:$0xf]
        %v413 = vld [vmem:[#allocation2 + $0xc] sm:$0xf]
        %v414 = vld [vmem:[#allocation2 + $0x10] sm:$0xf]
        %v415 = vld [vmem:[#allocation2 + $0x14] sm:$0xf]
        %v416 = vld [vmem:[#allocation2 + $0x18] sm:$0xf]
        %v417 = vld [vmem:[#allocation2 + $0x1c] sm:$0xf]
        %v418 = vld [vmem:[#allocation2 + $0x20] sm:$0xf]
        %v419 = vld [vmem:[#allocation2 + $0x24] sm:$0xf]
        %v420 = vld [vmem:[#allocation2 + $0x28] sm:$0xf]
        %v421 = vld [vmem:[#allocation2 + $0x2c] sm:$0xf]
        %v422 = vld [vmem:[#allocation2 + $0x30] sm:$0xf]
        %v423 = vld [vmem:[#allocation2 + $0x34] sm:$0xf]
        %v424 = vld [vmem:[#allocation2 + $0x38] sm:$0xf]
        %v425 = vld [vmem:[#allocation2 + $0x3c] sm:$0xf]
        %v426 = vld [vmem:[#allocation2 + $0x40] sm:$0xf]
        %v427 = vld [vmem:[#allocation2 + $0x44] sm:$0xf]
        %v428 = vld [vmem:[#allocation2 + $0x48] sm:$0xf]
        %v429 = vld [vmem:[#allocation2 + $0x4c] sm:$0xf]
        %v430 = vld [vmem:[#allocation2 + $0x50] sm:$0xf]
        %v431 = vld [vmem:[#allocation2 + $0x54] sm:$0xf]
        %v432 = vld [vmem:[#allocation2 + $0x58] sm:$0xf]
        %v433 = vld [vmem:[#allocation2 + $0x5c] sm:$0xf]
        %v434 = vld [vmem:[#allocation2 + $0x60] sm:$0xf]
        %v435 = vld [vmem:[#allocation2 + $0x64] sm:$0xf]
        %v436 = vld [vmem:[#allocation2 + $0x68] sm:$0xf]
        %v437 = vld [vmem:[#allocation2 + $0x6c] sm:$0xf]
        %v438 = vld [vmem:[#allocation2 + $0x70] sm:$0xf]
        %v439 = vld [vmem:[#allocation2 + $0x74] sm:$0xf]
        %v440 = vld [vmem:[#allocation2 + $0x78] sm:$0xf]
        %v441 = vld [vmem:[#allocation2 + $0x7c] sm:$0xf]
        %v442 = vld [vmem:[%s4] sm:$0x1]
        %v444 = vlaneseq
        %v445 = vshrl.u32 %v444, 7
        %v446 = vsub.s32 0, %v445
        %v447 = vrot.slane %v442, %v446
        %v481 = vunpack.c.l.b16 %v410
        %v482 = vunpack.c.l.b16 %v411
        %v483 = vunpack.c.l.b16 %v412
        %v484 = vunpack.c.l.b16 %v413
        %v485 = vunpack.c.l.b16 %v414
        %v486 = vunpack.c.l.b16 %v415
        %v487 = vunpack.c.l.b16 %v416
        %v488 = vunpack.c.l.b16 %v417
        %v489 = vunpack.c.l.b16 %v418
        %v490 = vunpack.c.l.b16 %v419
        %v491 = vunpack.c.l.b16 %v420
        %v492 = vunpack.c.l.b16 %v421
        %v493 = vunpack.c.l.b16 %v422
        %v494 = vunpack.c.l.b16 %v423
        %v495 = vunpack.c.l.b16 %v424
        %v496 = vunpack.c.l.b16 %v425
        %v497 = vunpack.c.l.b16 %v426
        %v498 = vunpack.c.l.b16 %v427
        %v499 = vunpack.c.l.b16 %v428
        %v500 = vunpack.c.l.b16 %v429
        %v501 = vunpack.c.l.b16 %v430
        %v502 = vunpack.c.l.b16 %v431
        %v503 = vunpack.c.l.b16 %v432
        %v504 = vunpack.c.l.b16 %v433
        %v505 = vunpack.c.l.b16 %v434
        %v506 = vunpack.c.l.b16 %v435
        %v507 = vunpack.c.l.b16 %v436
        %v508 = vunpack.c.l.b16 %v437
        %v509 = vunpack.c.l.b16 %v438
        %v510 = vunpack.c.l.b16 %v439
        %v511 = vunpack.c.l.b16 %v440
        %v512 = vunpack.c.l.b16 %v441
        %v513 = vpack.c.b16 %v482, %v481
        %v514 = vpack.c.b16 %v484, %v483
        %v515 = vpack.c.b16 %v486, %v485
        %v516 = vpack.c.b16 %v488, %v487
        %v517 = vpack.c.b16 %v490, %v489
        %v518 = vpack.c.b16 %v492, %v491
        %v519 = vpack.c.b16 %v494, %v493
        %v520 = vpack.c.b16 %v496, %v495
        %v521 = vpack.c.b16 %v498, %v497
        %v522 = vpack.c.b16 %v500, %v499
        %v523 = vpack.c.b16 %v502, %v501
        %v524 = vpack.c.b16 %v504, %v503
        %v525 = vpack.c.b16 %v506, %v505
        %v526 = vpack.c.b16 %v508, %v507
        %v527 = vpack.c.b16 %v510, %v509
        %v528 = vpack.c.b16 %v512, %v511
        %545 = vmatprep.subr.bf16.mxu0 0
        %546 = vmatpush1.bf16.msra.mxu0 %v513
        %547 = vmatprep.subr.bf16.mxu0 0
        %548 = vmatpush1.bf16.msra.mxu0 %v514
        %549 = vmatprep.subr.bf16.mxu0 0
        %550 = vmatpush1.bf16.msra.mxu0 %v515
        %551 = vmatprep.subr.bf16.mxu0 0
        %552 = vmatpush1.bf16.msra.mxu0 %v516
        %553 = vmatprep.subr.bf16.mxu0 0
        %554 = vmatpush1.bf16.msra.mxu0 %v517
        %555 = vmatprep.subr.bf16.mxu0 0
        %556 = vmatpush1.bf16.msra.mxu0 %v518
        %557 = vmatprep.subr.bf16.mxu0 0
        %558 = vmatpush1.bf16.msra.mxu0 %v519
        %559 = vmatprep.subr.bf16.mxu0 0
        %560 = vmatpush1.bf16.msra.mxu0 %v520
        %561 = vmatprep.subr.bf16.mxu0 0
        %562 = vmatpush1.bf16.msra.mxu0 %v521
        %563 = vmatprep.subr.bf16.mxu0 0
        %564 = vmatpush1.bf16.msra.mxu0 %v522
        %565 = vmatprep.subr.bf16.mxu0 0
        %566 = vmatpush1.bf16.msra.mxu0 %v523
        %567 = vmatprep.subr.bf16.mxu0 0
        %568 = vmatpush1.bf16.msra.mxu0 %v524
        %569 = vmatprep.subr.bf16.mxu0 0
        %570 = vmatpush1.bf16.msra.mxu0 %v525
        %571 = vmatprep.subr.bf16.mxu0 0
        %572 = vmatpush1.bf16.msra.mxu0 %v526
        %573 = vmatprep.subr.bf16.mxu0 0
        %574 = vmatpush1.bf16.msra.mxu0 %v527
        %575 = vmatprep.subr.bf16.mxu0 0
        %576 = vmatpush1.bf16.msra.mxu0 %v528
        %577 = vmatprep.mubr.bf16.mxu0 %v407
        %578 = vmatmul.mubr.bf16.gmra.mrb[0].mxu0 %v406
        %v579 = vpop.f32.mrb[0].mxu0
        %v580 = vadd.f32 %v447, %v579
        %v581 = vpop.f32.mrb[0].mxu0
        %v582 = vpop.f32.mrb[0].mxu0
        %v583 = vadd.f32 %v447, %v582
        %v584 = vpop.f32.mrb[0].mxu0
        %585 = vmatprep.mubr.bf16.mxu0 %v409
        %586 = vmatmul.mubr.bf16.gmra.mrb[0].mxu0 %v408
        %v587 = vpop.f32.mrb[0].mxu0
        %v588 = vadd.f32 %v447, %v587
        %v589 = vpop.f32.mrb[0].mxu0
        %v590 = vpop.f32.mrb[0].mxu0
        %v591 = vadd.f32 %v447, %v590
        %v592 = vpop.f32.mrb[0].mxu0
        %593 = vdwg.mxu0
        %v594 = vmax.f32 %v580, 0.0
        %v595 = vmax.f32 %v583, 0.0
        %v596 = vmax.f32 %v588, 0.0
        %v597 = vmax.f32 %v591, 0.0
        %v598 = vpack.c.bf16 %v595, %v594
        %v599 = vpack.c.bf16 %v597, %v596
        %v600 = vld [vmem:[%s5] sm:$0xf]
        %v601 = vld [vmem:[%s5 + $0x4] sm:$0xf]
        %v602 = vld [vmem:[%s5 + $0x8] sm:$0xf]
        %v603 = vld [vmem:[%s5 + $0xc] sm:$0xf]
        %v604 = vld [vmem:[%s5 + $0x10] sm:$0xf]
        %v605 = vld [vmem:[%s5 + $0x14] sm:$0xf]
        %v606 = vld [vmem:[%s5 + $0x18] sm:$0xf]
        %v607 = vld [vmem:[%s5 + $0x1c] sm:$0xf]
        %v608 = vld [vmem:[%s5 + $0x20] sm:$0xf]
        %v609 = vld [vmem:[%s5 + $0x24] sm:$0xf]
        %v610 = vld [vmem:[%s5 + $0x28] sm:$0xf]
        %v611 = vld [vmem:[%s5 + $0x2c] sm:$0xf]
        %v612 = vld [vmem:[%s5 + $0x30] sm:$0xf]
        %v613 = vld [vmem:[%s5 + $0x34] sm:$0xf]
        %v614 = vld [vmem:[%s5 + $0x38] sm:$0xf]
        %v615 = vld [vmem:[%s5 + $0x3c] sm:$0xf]
        %v616 = vld [vmem:[%s6] sm:$0x1]
        %v618 = vlaneseq
        %v619 = vshrl.u32 %v618, 7
        %v620 = vsub.s32 0, %v619
        %v621 = vrot.slane %v616, %v620
        %v639 = vunpack.c.l.b16 %v600
        %v640 = vunpack.c.l.b16 %v601
        %v641 = vunpack.c.l.b16 %v602
        %v642 = vunpack.c.l.b16 %v603
        %v643 = vunpack.c.l.b16 %v604
        %v644 = vunpack.c.l.b16 %v605
        %v645 = vunpack.c.l.b16 %v606
        %v646 = vunpack.c.l.b16 %v607
        %v647 = vunpack.c.l.b16 %v608
        %v648 = vunpack.c.l.b16 %v609
        %v649 = vunpack.c.l.b16 %v610
        %v650 = vunpack.c.l.b16 %v611
        %v651 = vunpack.c.l.b16 %v612
        %v652 = vunpack.c.l.b16 %v613
        %v653 = vunpack.c.l.b16 %v614
        %v654 = vunpack.c.l.b16 %v615
        %v655 = vpack.c.b16 %v640, %v639
        %v656 = vpack.c.b16 %v642, %v641
        %v657 = vpack.c.b16 %v644, %v643
        %v658 = vpack.c.b16 %v646, %v645
        %v659 = vpack.c.b16 %v648, %v647
        %v660 = vpack.c.b16 %v650, %v649
        %v661 = vpack.c.b16 %v652, %v651
        %v662 = vpack.c.b16 %v654, %v653
        %671 = vmatprep.subr.bf16.mxu0 0
        %672 = vmatpush1.bf16.msra.mxu0 %v655
        %673 = vmatprep.subr.bf16.mxu0 0
        %674 = vmatpush1.bf16.msra.mxu0 %v656
        %675 = vmatprep.subr.bf16.mxu0 0
        %676 = vmatpush1.bf16.msra.mxu0 %v657
        %677 = vmatprep.subr.bf16.mxu0 0
        %678 = vmatpush1.bf16.msra.mxu0 %v658
        %679 = vmatprep.subr.bf16.mxu0 0
        %680 = vmatpush1.bf16.msra.mxu0 %v659
        %681 = vmatprep.subr.bf16.mxu0 0
        %682 = vmatpush1.bf16.msra.mxu0 %v660
        %683 = vmatprep.subr.bf16.mxu0 0
        %684 = vmatpush1.bf16.msra.mxu0 %v661
        %685 = vmatprep.subr.bf16.mxu0 0
        %686 = vmatpush1.bf16.msra.mxu0 %v662
        %687 = vmatprep.subr.bf16.mxu0 0
        %688 = vmatpush1.bf16.msra.mxu0 0
        %689 = vmatprep.subr.bf16.mxu0 0
        %690 = vmatpush1.bf16.msra.mxu0 0
        %691 = vmatprep.subr.bf16.mxu0 0
        %692 = vmatpush1.bf16.msra.mxu0 0
        %693 = vmatprep.subr.bf16.mxu0 0
        %694 = vmatpush1.bf16.msra.mxu0 0
        %695 = vmatprep.subr.bf16.mxu0 0
        %696 = vmatpush1.bf16.msra.mxu0 0
        %697 = vmatprep.subr.bf16.mxu0 0
        %698 = vmatpush1.bf16.msra.mxu0 0
        %699 = vmatprep.subr.bf16.mxu0 0
        %700 = vmatpush1.bf16.msra.mxu0 0
        %701 = vmatprep.subr.bf16.mxu0 0
        %702 = vmatpush1.bf16.msra.mxu0 0
        %703 = vmatprep.mubr.bf16.mxu0 0
        %704 = vmatmul.mubr.bf16.gmra.mrb[0].mxu0 %v598
        %v705 = vpop.f32.mrb[0].mxu0
        %v706 = vadd.f32 %v621, %v705
        %v707 = vpop.f32.mrb[0].mxu0
        %v708 = vpop.f32.mrb[0].mxu0
        %v709 = vadd.f32 %v621, %v708
        %v710 = vpop.f32.mrb[0].mxu0
        %711 = vmatprep.mubr.bf16.mxu0 0
        %712 = vmatmul.mubr.bf16.gmra.mrb[0].mxu0 %v599
        %v713 = vpop.f32.mrb[0].mxu0
        %v714 = vadd.f32 %v621, %v713
        %v715 = vpop.f32.mrb[0].mxu0
        %v716 = vpop.f32.mrb[0].mxu0
        %v717 = vadd.f32 %v621, %v716
        %v718 = vpop.f32.mrb[0].mxu0
        %719 = vdwg.mxu0
        %720 = vst [vmem:[%s287] sm:$0xff] %v706
        %721 = vst [vmem:[%s287 + $0x8] sm:$0xff] %v709
        %722 = vst [vmem:[%s287 + $0x10] sm:$0xff] %v714
        %723 = vst [vmem:[%s287 + $0x18] sm:$0xff] %v717
        %s724 = sand.u32 %s182, 1
        %s725 = scalar_lea.sflag [#allocation4], %s724
        %s726 = sand.u32 %s182, 1
        %s727 = smul.addr %s726, 32
        %s728 = scalar_lea.vmem [#allocation5], %s727
        // Predicated region
        $region53: #{tpu_custom_call.1} parent=47 // pred_check
          %p729 = pneg %p192
        $region54: #{tpu_custom_call.1} parent=47 // pred_check_branch
          %731 = sbr.rel (%p729) target = $region56
        $region55: #{tpu_custom_call.1} parent=47 // pred_region
          %s732 = smul.u32 4, %s22
          %s734 = ssub.s32 512, 512
          %735 = vsyncadd %s725, %s734
          %s736 = smul.addr %s732, 128
          %s737 = scalar_lea.hbm %s7, %s736
          %s738 = sshll.u32 %s728, 4
          %s739 = int_to_ptr.vmem [resolvable:$true] %s738
          %744 = dma.vmem_to_hbm [thread:$0]  %s739, 512, %s737, %s725, 128, 128, 8
        $region56: #{tpu_custom_call.1} parent=47 // pred_fallthru
          _
      $region48: #{tpu_custom_call.1} parent=5 // pred_fallthru
        _
      %p745 = scmp.le.s32.totalorder 2, %s17
      // Predicated region
      $region57: #{tpu_custom_call.1} parent=5 // pred_check
        %p746 = pneg %p745
      $region58: #{tpu_custom_call.1} parent=5 // pred_check_branch
        %748 = sbr.rel (%p746) target = $region60
      $region59: #{tpu_custom_call.1} parent=5 // pred_region
        %s749 = ssub.s32 %s17, 2
        // Predicated region
        $region61: #{tpu_custom_call.1} parent=59 // pred_check
          %p750 = pneg %p198
        $region62: #{tpu_custom_call.1} parent=59 // pred_check_branch
          %752 = sbr.rel (%p750) target = $region64
        $region63: #{tpu_custom_call.1} parent=59 // pred_region
          %s753 = sand.u32 %s183, 1
          %s754 = scalar_lea.sflag [#allocation4], %s753
          %s755 = sand.u32 %s183, 1
          %s756 = smul.addr %s755, 32
          %s757 = scalar_lea.vmem [#allocation5], %s756
          %758 = dma.done %s754, 512
        $region64: #{tpu_custom_call.1} parent=59 // pred_fallthru
          _
      $region60: #{tpu_custom_call.1} parent=5 // pred_fallthru
        _
    $region6: #{tpu_custom_call.1} parent=1 // loop_footer
      %s21 = sadd.s32 1, %s17
    $region7: #{tpu_custom_call.1} parent=1 // loop_footer_branch
      %16 = sbr.rel target = $region3
    $region8: #{tpu_custom_call.1} parent=1 // loop_exit
      _
    %759 = vsyncpa [#allocation3], 1
    %s760 = scalar_lea.sflag [#allocation3], 1
    %761 = vsyncpa %s760, 1
    %762 = vsyncpa [#allocation4], 1
    %s763 = scalar_lea.sflag [#allocation4], 1
    %764 = vsyncpa %s763, 1

</llo_original>
